<compile_context>
chip_gen: v5e
topology: v5e:2x2
jax: 0.10.0
libtpu: 0.0.40
codegen_flags: <defaults>
</compile_context>

<pallas_src>
from functools import partial

import numpy as np
import jax
import jax.numpy as jnp
from jax.experimental import pallas as pl
from jax.experimental.pallas import tpu as pltpu

NEG_SLOPE = 0.1                      # LeakyReLU slope inside every MLP
_VMEM_LIMIT = 32 * 1024 * 1024       # explicit scoped-VMEM limit, safe on v5e/v6e/v7x


def _leaky(x):
    return jnp.where(x >= 0, x, NEG_SLOPE * x)


def _round_up(x, m):
    return ((x + m - 1) // m) * m


# ---------------- Kernel 1: all topological levels in one pallas_call -------------------------
# grid = one step per padded row block (levels are row-block aligned).  kind_ref (scalar
# prefetch, SMEM) says whether a block is a PI block (mlp_pi) or an internal block
# (mean-aggregate + fused mlp_neigh/mlp_self).  h is resident in a VMEM scratch for the whole
# kernel; each block writes its rows back so later levels read fresh values.
def fused_levels_kernel(kind_ref,                                   # scalar prefetch (SMEM)
                        a_ref, delay_ref, feat_ref, ispo_ref,
                        wp1_ref, bp1_ref, wp2_ref, bp2_ref,
                        w1n_ref, w1s_ref, b1_ref, w2_ref, b2_ref,
                        o_ref, h_vmem):
    b = pl.program_id(0)
    tm = o_ref.shape[0]

    @pl.when(b == 0)
    def _():
        h_vmem[...] = jnp.zeros_like(h_vmem)          # covers never-written (rest / pad) rows

    goff = pl.multiple_of(b * tm, tm)
    is_pi = kind_ref[b]

    @pl.when(is_pi == 1)
    def _():
        # nodes_func_pi: K == 1 first layer is a broadcasted outer product -> keep off the MXU.
        z = _leaky(delay_ref[...] * wp1_ref[...] + bp1_ref[...])
        hv = jnp.dot(z, wp2_ref[...], preferred_element_type=jnp.float32) + bp2_ref[...]
        o_ref[...] = hv
        h_vmem[pl.ds(goff, tm), :] = hv

    @pl.when(is_pi == 0)
    def _():
        # pull(copy_src, mean): row-normalized adjacency block (bf16 in HBM) @ resident h (f32).
        neigh = jnp.dot(a_ref[...].astype(jnp.float32), h_vmem[...],
                        preferred_element_type=jnp.float32)
        # fused mlp_neigh/mlp_self: block-diagonal first layer (two dots, no lane concat),
        # stacked second layer -> one dot.
        z = _leaky(jnp.dot(neigh, w1n_ref[...], preferred_element_type=jnp.float32)
                   + jnp.dot(feat_ref[...], w1s_ref[...], preferred_element_type=jnp.float32)
                   + b1_ref[...])
        hv = jnp.dot(z, w2_ref[...], preferred_element_type=jnp.float32) + b2_ref[...]
        hv = jnp.where(ispo_ref[...] == 1.0, hv, jnp.maximum(hv, 0.0))   # ReLU except PO rows
        o_ref[...] = hv
        h_vmem[pl.ds(goff, tm), :] = hv


def fused_forward(kind, A_all, delay_g, feat_g, ispo_g, p_pi, p_fused, *, tm, npi_blocks):
    wp1, bp1, wp2, bp2 = p_pi
    w1n, w1s, b1c, w2c, b2c = p_fused
    n_blocks = kind.shape[0]
    R = delay_g.shape[0]
    C = A_all.shape[1]
    hidden = w2c.shape[1]
    infeat = feat_g.shape[1]

    full = lambda a: pl.BlockSpec(a.shape, lambda b, k_ref: (0, 0))
    row = lambda w: pl.BlockSpec((tm, w), lambda b, k_ref: (b, 0))
    # PI blocks reuse A row-block 0 (never read there) so no extra DMA is issued for them.
    a_spec = pl.BlockSpec((tm, C), lambda b, k_ref: (jnp.maximum(b - npi_blocks, 0), 0))

    flops = int(2 * max(n_blocks - npi_blocks, 0) * tm * C * hidden
                + 2 * R * (hidden * w1n.shape[1] + infeat * w1s.shape[1]
                           + w2c.shape[0] * hidden))
    bytes_acc = int(A_all.size * A_all.dtype.itemsize
                    + (feat_g.size + delay_g.size + ispo_g.size + R * hidden) * 4)

    return pl.pallas_call(
        fused_levels_kernel,
        out_shape=jax.ShapeDtypeStruct((R, hidden), jnp.float32),
        grid_spec=pltpu.PrefetchScalarGridSpec(
            num_scalar_prefetch=1,
            grid=(n_blocks,),
            in_specs=[a_spec,
                      row(1),                 # delay  (PI levels)
                      row(infeat),            # self features
                      row(1),                 # is_po flag
                      full(wp1), full(bp1), full(wp2), full(bp2),
                      full(w1n), full(w1s), full(b1c), full(w2c), full(b2c)],
            out_specs=row(hidden),
            scratch_shapes=[pltpu.VMEM((C, hidden), jnp.float32)]),
        compiler_params=pltpu.CompilerParams(
            dimension_semantics=("arbitrary",),      # sequential: later levels read h scratch
            vmem_limit_bytes=_VMEM_LIMIT),
        cost_estimate=pl.CostEstimate(flops=flops, transcendentals=0,
                                      bytes_accessed=bytes_acc),
    )(kind, A_all, delay_g, feat_g, ispo_g,
      wp1, bp1, wp2, bp2, w1n, w1s, b1c, w2c, b2c)


# ---------------- Kernel 2: readout  cat([h_gnn, mlp_global(PO_feat)], 1) -> mlp_out ----------
def out_kernel(hgnn_ref, pofeat_ref,
               wg1_ref, bg1_ref, wg2_ref, bg2_ref,
               wo1a_ref, wo1b_ref, bo1_ref, wo2_ref, bo2_ref, o_ref):
    zg = _leaky(pofeat_ref[...] * wg1_ref[...] + bg1_ref[...])            # K == 1 first layer
    h_global = jnp.dot(zg, wg2_ref[...], preferred_element_type=jnp.float32) + bg2_ref[...]
    # cat([h_gnn, h_global], 1) @ Wo1  ==  h_gnn @ Wo1[:H] + h_global @ Wo1[H:]
    z = _leaky(jnp.dot(hgnn_ref[...], wo1a_ref[...], preferred_element_type=jnp.float32)
               + jnp.dot(h_global, wo1b_ref[...], preferred_element_type=jnp.float32)
               + bo1_ref[...])
    o_ref[...] = jnp.dot(z, wo2_ref[...], preferred_element_type=jnp.float32) + bo2_ref[...]


def readout_forward(h_gnn, po_feat, p_global, wo1a, wo1b, bo1, wo2, bo2, tm):
    rows_pad, hidden = h_gnn.shape
    wg1, bg1, wg2, bg2 = p_global
    full = lambda a: pl.BlockSpec(a.shape, lambda i: (0, 0))
    # TODO(synk): out width 1 -> masked stores; only worth packing lane-dense for huge PO sets.
    return pl.pallas_call(
        out_kernel,
        out_shape=jax.ShapeDtypeStruct((rows_pad, 1), jnp.float32),
        grid_spec=pltpu.PrefetchScalarGridSpec(
            num_scalar_prefetch=0, grid=(rows_pad // tm,),
            in_specs=[pl.BlockSpec((tm, hidden), lambda i: (i, 0)),
                      pl.BlockSpec((tm, 1), lambda i: (i, 0)),
                      full(wg1), full(bg1), full(wg2), full(bg2),
                      full(wo1a), full(wo1b), full(bo1), full(wo2), full(bo2)],
            out_specs=pl.BlockSpec((tm, 1), lambda i: (i, 0))),
        compiler_params=pltpu.CompilerParams(
            dimension_semantics=("parallel",), vmem_limit_bytes=_VMEM_LIMIT),
    )(h_gnn, po_feat, wg1, bg1, wg2, bg2, wo1a, wo1b, bo1, wo2, bo2)


# ---------------------------------- jitted forward --------------------------------------------
@partial(jax.jit, static_argnums=(0,))
def _forward_jit(meta, params, kind, A_all, row_src, row_valid, po_rows, po_valid,
                 feat, delay, is_po, po_feat):
    tm, npi_blocks, n_po, n_po_pad, tm_out = meta
    hidden = params['pi'][2].shape[1]
    infeat = feat.shape[1]

    # gather node-major tensors into the padded, topological-level-contiguous row layout
    feat_g = feat[row_src] * row_valid
    delay_g = delay[row_src] * row_valid
    ispo_g = is_po[row_src] * row_valid

    # pre-stack the fused level-MLP weights (block-diag layer 1, stacked layer 2)
    wn1, bn1, wn2, bn2 = params['neigh']
    ws1, bs1, ws2, bs2 = params['self']
    half = wn1.shape[1]
    w1n = jnp.concatenate([wn1, jnp.zeros((hidden, half), jnp.float32)], axis=1)   # [H, 2*half]
    w1s = jnp.concatenate([jnp.zeros((infeat, half), jnp.float32), ws1], axis=1)   # [F, 2*half]
    b1c = jnp.concatenate([bn1, bs1], axis=1)                                      # [1, 2*half]
    w2c = jnp.concatenate([wn2, ws2], axis=0)                                      # [2*half, H]
    b2c = bn2 + bs2                                                                # [1, H]

    h_out = fused_forward(kind, A_all, delay_g, feat_g, ispo_g,
                          params['pi'], (w1n, w1s, b1c, w2c, b2c),
                          tm=tm, npi_blocks=npi_blocks)

    # readout over primary outputs
    h_gnn = h_out[po_rows] * po_valid
    po_f = jnp.pad(po_feat, ((0, n_po_pad - po_feat.shape[0]), (0, 0)))
    wo1a = params['out_w1'][:hidden]
    wo1b = params['out_w1'][hidden:]
    out = readout_forward(h_gnn, po_f, params['global'], wo1a, wo1b,
                          params['out_b1'], params['out_w2'], params['out_b2'], tm_out)
    return out[:n_po]


def timeconv_forward_pallas(params, topo, A_norm, feat, delay, is_po, po_mask, po_feat,
                            *, tm=128):
    """Host-side graph preprocessing (static structure) + jitted Pallas forward."""
    N = int(A_norm.shape[0])
    A_np = np.asarray(A_norm, np.float32)

    level_nodes = [np.asarray(lv, np.int64).ravel() for lv in topo]
    all_lvl = np.concatenate(level_nodes)
    rest = np.setdiff1d(np.arange(N, dtype=np.int64), all_lvl)   # nodes not in topo: h stays 0

    # row tile: multiple of 8, no larger than the widest level needs
    max_lvl = max(len(lv) for lv in level_nodes)
    tm = _round_up(max(8, min(int(tm), _round_up(max_lvl, 8))), 8)

    # global padded layout: each level is a contiguous, tm-aligned block of rows
    node_to_row = np.full(N, -1, np.int64)
    kind_blocks, goffs = [], []
    g = 0
    for i, lv in enumerate(level_nodes):
        cnt = len(lv)
        rows_pad = _round_up(cnt, tm)
        node_to_row[lv] = g + np.arange(cnt)
        goffs.append(g)
        kind_blocks += [1 if i == 0 else 0] * (rows_pad // tm)
        g += rows_pad
    R_levels = g
    node_to_row[rest] = R_levels + np.arange(len(rest))          # columns only (h == 0)
    C = _round_up(R_levels + len(rest), 128)                     # lane-aligned column count
    n_blocks = len(kind_blocks)
    pi_rows_pad = _round_up(len(level_nodes[0]), tm)
    npi_blocks = pi_rows_pad // tm

    # padded-row -> source-node gather index + validity mask
    row_src = np.zeros(R_levels, np.int32)
    row_valid = np.zeros((R_levels, 1), np.float32)
    for lv, g0 in zip(level_nodes, goffs):
        row_src[g0:g0 + len(lv)] = lv
        row_valid[g0:g0 + len(lv), 0] = 1.0

    # dense row-normalized adjacency for the non-PI rows, columns in padded global order
    R_nonpi = R_levels - pi_rows_pad
    A_all = np.zeros((max(R_nonpi, tm), C), np.float32)
    for i in range(1, len(level_nodes)):
        lv = level_nodes[i]
        r0 = goffs[i] - pi_rows_pad
        A_all[r0:r0 + len(lv), node_to_row] = A_np[lv, :]

    # primary outputs
    po_nodes = np.asarray(po_mask, np.int64).ravel()
    n_po = len(po_nodes)
    po_rows = node_to_row[po_nodes]
    po_ok = po_rows < R_levels
    po_rows = np.where(po_ok, po_rows, 0).astype(np.int32)
    if _round_up(n_po, 8) <= 128:
        n_po_pad = _round_up(n_po, 8)
        tm_out = n_po_pad
    else:
        tm_out = 128
        n_po_pad = _round_up(n_po, tm_out)
    po_rows_pad = np.zeros(n_po_pad, np.int32)
    po_rows_pad[:n_po] = po_rows
    po_valid_pad = np.zeros((n_po_pad, 1), np.float32)
    po_valid_pad[:n_po, 0] = po_ok.astype(np.float32)

    meta = (int(tm), int(npi_blocks), int(n_po), int(n_po_pad), int(tm_out))
    return _forward_jit(meta, params,
                        jnp.asarray(kind_blocks, jnp.int32),
                        jnp.asarray(A_all, jnp.bfloat16),        # bf16 adjacency (f32 accum)
                        jnp.asarray(row_src), jnp.asarray(row_valid),
                        jnp.asarray(po_rows_pad), jnp.asarray(po_valid_pad),
                        feat, delay, is_po, po_feat)


# ---------------------------------- pure-JAX reference ----------------------------------------
def _mlp2_ref(x, w1, b1, w2, b2):
    return _leaky(x @ w1 + b1) @ w2 + b2


def timeconv_forward_ref(params, topo, A_norm, feat, delay, is_po, po_mask, po_feat):
    N = feat.shape[0]
    hidden = params['pi'][2].shape[1]
    h = jnp.zeros((N, hidden), jnp.float32)
    for i, nodes in enumerate(topo):
        idx = jnp.asarray(nodes)
        if i == 0:
            h_lvl = _mlp2_ref(delay[idx], *params['pi'])
        else:
            neigh = A_norm[idx] @ h
            h_lvl = _mlp2_ref(neigh, *params['neigh']) + _mlp2_ref(feat[idx], *params['self'])
            h_lvl = jnp.where(is_po[idx] == 1.0, h_lvl, jnp.maximum(h_lvl, 0.0))
        h = h.at[idx].set(h_lvl)
    h_gnn = h[jnp.asarray(po_mask)]
    h_global = _mlp2_ref(po_feat, *params['global'])
    hcat = jnp.concatenate([h_gnn, h_global], axis=1)
    return _leaky(hcat @ params['out_w1'] + params['out_b1']) @ params['out_w2'] + params['out_b2']


if __name__ == "__main__":
    infeat_dim, hidden = 8, 32
    half = hidden // 2
    key = jax.random.PRNGKey(0)
    keys = jax.random.split(key, 16)

    def linear(k, fan_in, fan_out):
        kw, kb = jax.random.split(k)
        bound = 1.0 / np.sqrt(fan_in)
        w = jax.random.uniform(kw, (fan_in, fan_out), jnp.float32, -bound, bound)
        b = jax.random.uniform(kb, (1, fan_out), jnp.float32, -bound, bound)
        return w, b

    w_pi1, b_pi1 = linear(keys[0], 1, half);          w_pi2, b_pi2 = linear(keys[1], half, hidden)
    w_n1, b_n1 = linear(keys[2], hidden, half);       w_n2, b_n2 = linear(keys[3], half, hidden)
    w_s1, b_s1 = linear(keys[4], infeat_dim, half);   w_s2, b_s2 = linear(keys[5], half, hidden)
    w_g1, b_g1 = linear(keys[6], 1, half);            w_g2, b_g2 = linear(keys[7], half, hidden)
    w_o1, b_o1 = linear(keys[8], 2 * hidden, hidden); w_o2, b_o2 = linear(keys[9], hidden, 1)

    params = {
        'pi': (w_pi1, b_pi1, w_pi2, b_pi2),
        'neigh': (w_n1, b_n1, w_n2, b_n2),
        'self': (w_s1, b_s1, w_s2, b_s2),
        'global': (w_g1, b_g1, w_g2, b_g2),
        'out_w1': w_o1, 'out_b1': b_o1, 'out_w2': w_o2, 'out_b2': b_o2,
    }

    # ---- tiny synthetic DAG: 8 primary inputs -> 8 internal nodes -> 8 primary outputs ----
    N = 24
    level0 = list(range(0, 8))      # PIs (topo level 0)
    level1 = list(range(8, 16))     # internal
    level2 = list(range(16, 24))    # POs
    topo = [level0, level1, level2]
    po_mask = list(level2)

    edges = []
    for j in range(8):
        for s in (j, (j + 1) % 8, (j + 3) % 8):
            edges.append((s, 8 + j))
    for j in range(8):
        for s in (8 + j, 8 + (j + 2) % 8):
            edges.append((s, 16 + j))
    A = np.zeros((N, N), np.float32)
    for s, d in edges:
        A[d, s] = 1.0
    indeg = A.sum(axis=1, keepdims=True)
    A_norm = jnp.asarray(np.where(indeg > 0, A / np.maximum(indeg, 1.0), 0.0).astype(np.float32))

    feat = jax.random.normal(keys[10], (N, infeat_dim), jnp.float32)        # node features
    delay = jax.random.uniform(keys[11], (N, 1), jnp.float32)               # PI delays
    po_feat = jax.random.uniform(keys[12], (len(po_mask), 1), jnp.float32)  # POs_feat
    is_po = jnp.zeros((N, 1), jnp.float32).at[jnp.asarray(po_mask)].set(1.0)

    rst = timeconv_forward_pallas(params, topo, A_norm, feat, delay, is_po, po_mask, po_feat)
    rst = jax.block_until_ready(rst)

    rst_ref = timeconv_forward_ref(params, topo, A_norm, feat, delay, is_po, po_mask, po_feat)
    np.testing.assert_allclose(np.asarray(rst), np.asarray(rst_ref), rtol=2e-2, atol=2e-2)

    print("KERNEL_OK")
</pallas_src>

<mosaic_0001>
module attributes {stable_mosaic.version = 11 : i64} {
  func.func @fused_levels_kernel(%arg0: i32, %arg1: memref<3xi32, #tpu.memory_space<smem>>, %arg2: memref<8x128xbf16, #tpu.memory_space<vmem>>, %arg3: memref<8x1xf32, #tpu.memory_space<vmem>>, %arg4: memref<8x8xf32, #tpu.memory_space<vmem>>, %arg5: memref<8x1xf32, #tpu.memory_space<vmem>>, %arg6: memref<1x16xf32, #tpu.memory_space<vmem>>, %arg7: memref<1x16xf32, #tpu.memory_space<vmem>>, %arg8: memref<16x32xf32, #tpu.memory_space<vmem>>, %arg9: memref<1x32xf32, #tpu.memory_space<vmem>>, %arg10: memref<32x32xf32, #tpu.memory_space<vmem>>, %arg11: memref<8x32xf32, #tpu.memory_space<vmem>>, %arg12: memref<1x32xf32, #tpu.memory_space<vmem>>, %arg13: memref<32x32xf32, #tpu.memory_space<vmem>>, %arg14: memref<1x32xf32, #tpu.memory_space<vmem>>, %arg15: memref<8x32xf32, #tpu.memory_space<vmem>>, %arg16: memref<128x32xf32, #tpu.memory_space<vmem>>) attributes {dimension_semantics = [#tpu.dimension_semantics<arbitrary>], iteration_bounds = array<i64: 3>, scalar_prefetch = 1 : i64, scratch_operands = 1 : i64, tpu.core_type = #tpu.core_type<tc>, window_params = [{transform_indices = @transform_0, window_bounds = array<i64: 8, 128>}, {transform_indices = @transform_1, window_bounds = array<i64: 8, 1>}, {transform_indices = @transform_2, window_bounds = array<i64: 8, 8>}, {transform_indices = @transform_3, window_bounds = array<i64: 8, 1>}, {pipeline_mode = #tpu.pipeline_mode<synchronous>, transform_indices = @transform_4, window_bounds = array<i64: 1, 16>}, {pipeline_mode = #tpu.pipeline_mode<synchronous>, transform_indices = @transform_5, window_bounds = array<i64: 1, 16>}, {pipeline_mode = #tpu.pipeline_mode<synchronous>, transform_indices = @transform_6, window_bounds = array<i64: 16, 32>}, {pipeline_mode = #tpu.pipeline_mode<synchronous>, transform_indices = @transform_7, window_bounds = array<i64: 1, 32>}, {pipeline_mode = #tpu.pipeline_mode<synchronous>, transform_indices = @transform_8, window_bounds = array<i64: 32, 32>}, {pipeline_mode = #tpu.pipeline_mode<synchronous>, transform_indices = @transform_9, window_bounds = array<i64: 8, 32>}, {pipeline_mode = #tpu.pipeline_mode<synchronous>, transform_indices = @transform_10, window_bounds = array<i64: 1, 32>}, {pipeline_mode = #tpu.pipeline_mode<synchronous>, transform_indices = @transform_11, window_bounds = array<i64: 32, 32>}, {pipeline_mode = #tpu.pipeline_mode<synchronous>, transform_indices = @transform_12, window_bounds = array<i64: 1, 32>}, {transform_indices = @transform_13, window_bounds = array<i64: 8, 32>}]} {
    %c0_i32 = arith.constant 0 : i32
    %0 = arith.cmpi eq, %arg0, %c0_i32 : i32
    %1 = arith.extui %0 : i1 to i32
    %c0_i32_0 = arith.constant 0 : i32
    %2 = arith.cmpi ne, %1, %c0_i32_0 : i32
    scf.if %2 {
      %cst = arith.constant 0.000000e+00 : f32
      %13 = vector.broadcast %cst : f32 to vector<128x32xf32>
      %c0 = arith.constant 0 : index
      %c0_4 = arith.constant 0 : index
      %14 = vector.load %arg16[%c0, %c0_4] : memref<128x32xf32, #tpu.memory_space<vmem>>, vector<128x32xf32>
      tpu.vector_store %arg16[%c0, %c0_4], %13 {strides = array<i32>} : memref<128x32xf32, #tpu.memory_space<vmem>>, vector<128x32xf32>,
    } else {
    }
    %c8_i32 = arith.constant 8 : i32
    %3 = arith.muli %arg0, %c8_i32 : i32
    %4 = tpu.assume_multiple %3, 8 : i32
    %5 = arith.index_cast %arg0 : i32 to index
    %6 = memref.load %arg1[%5] : memref<3xi32, #tpu.memory_space<smem>>
    %c1_i32 = arith.constant 1 : i32
    %7 = arith.cmpi eq, %6, %c1_i32 : i32
    %8 = arith.extui %7 : i1 to i32
    %c0_i32_1 = arith.constant 0 : i32
    %9 = arith.cmpi ne, %8, %c0_i32_1 : i32
    scf.if %9 {
      %c0 = arith.constant 0 : index
      %c0_4 = arith.constant 0 : index
      %13 = vector.load %arg3[%c0, %c0_4] : memref<8x1xf32, #tpu.memory_space<vmem>>, vector<8x1xf32>
      %c0_5 = arith.constant 0 : index
      %c0_6 = arith.constant 0 : index
      %14 = vector.load %arg6[%c0_5, %c0_6] : memref<1x16xf32, #tpu.memory_space<vmem>>, vector<1x16xf32>
      %15 = vector.broadcast %13 : vector<8x1xf32> to vector<8x16xf32>
      %16 = vector.broadcast %14 : vector<1x16xf32> to vector<8x16xf32>
      %17 = arith.mulf %15, %16 : vector<8x16xf32>
      %c0_7 = arith.constant 0 : index
      %c0_8 = arith.constant 0 : index
      %18 = vector.load %arg7[%c0_7, %c0_8] : memref<1x16xf32, #tpu.memory_space<vmem>>, vector<1x16xf32>
      %19 = vector.broadcast %18 : vector<1x16xf32> to vector<8x16xf32>
      %20 = arith.addf %17, %19 : vector<8x16xf32>
      %cst = arith.constant 0.000000e+00 : f32
      %21 = vector.broadcast %cst : f32 to vector<8x16xf32>
      %22 = arith.cmpf oge, %20, %21 : vector<8x16xf32>
      %cst_9 = arith.constant 1.000000e-01 : f32
      %23 = vector.broadcast %cst_9 : f32 to vector<8x16xf32>
      %24 = arith.mulf %23, %20 : vector<8x16xf32>
      %25 = arith.select %22, %20, %24 : vector<8x16xi1>, vector<8x16xf32>
      %c0_10 = arith.constant 0 : index
      %c0_11 = arith.constant 0 : index
      %26 = vector.load %arg8[%c0_10, %c0_11] : memref<16x32xf32, #tpu.memory_space<vmem>>, vector<16x32xf32>
      %cst_12 = arith.constant dense<0.000000e+00> : vector<8x32xf32>
      %27 = tpu.matmul %25, %26, %cst_12 {dimension_numbers = #tpu.dot_dimension_numbers<[1], [0], [0], [1], [0, 0, 1, 1], [], []>} : vector<8x16xf32>, vector<16x32xf32>, vector<8x32xf32> -> vector<8x32xf32>
      %c0_13 = arith.constant 0 : index
      %c0_14 = arith.constant 0 : index
      %28 = vector.load %arg9[%c0_13, %c0_14] : memref<1x32xf32, #tpu.memory_space<vmem>>, vector<1x32xf32>
      %29 = vector.broadcast %28 : vector<1x32xf32> to vector<8x32xf32>
      %30 = arith.addf %27, %29 : vector<8x32xf32>
      %c0_15 = arith.constant 0 : index
      %c0_16 = arith.constant 0 : index
      %31 = vector.load %arg15[%c0_15, %c0_16] : memref<8x32xf32, #tpu.memory_space<vmem>>, vector<8x32xf32>
      tpu.vector_store %arg15[%c0_15, %c0_16], %30 {strides = array<i32>} : memref<8x32xf32, #tpu.memory_space<vmem>>, vector<8x32xf32>,
      %32 = arith.index_cast %4 : i32 to index
      %c0_17 = arith.constant 0 : index
      %33 = vector.load %arg16[%32, %c0_17] : memref<128x32xf32, #tpu.memory_space<vmem>>, vector<8x32xf32>
      tpu.vector_store %arg16[%32, %c0_17], %30 {strides = array<i32>} : memref<128x32xf32, #tpu.memory_space<vmem>>, vector<8x32xf32>,
    } else {
    }
    %c0_i32_2 = arith.constant 0 : i32
    %10 = arith.cmpi eq, %6, %c0_i32_2 : i32
    %11 = arith.extui %10 : i1 to i32
    %c0_i32_3 = arith.constant 0 : i32
    %12 = arith.cmpi ne, %11, %c0_i32_3 : i32
    scf.if %12 {
      %c0 = arith.constant 0 : index
      %c0_4 = arith.constant 0 : index
      %13 = vector.load %arg2[%c0, %c0_4] : memref<8x128xbf16, #tpu.memory_space<vmem>>, vector<8x128xbf16>
      %14 = arith.extf %13 : vector<8x128xbf16> to vector<8x128xf32>
      %c0_5 = arith.constant 0 : index
      %c0_6 = arith.constant 0 : index
      %15 = vector.load %arg16[%c0_5, %c0_6] : memref<128x32xf32, #tpu.memory_space<vmem>>, vector<128x32xf32>
      %cst = arith.constant dense<0.000000e+00> : vector<8x32xf32>
      %16 = tpu.matmul %14, %15, %cst {dimension_numbers = #tpu.dot_dimension_numbers<[1], [0], [0], [1], [0, 0, 1, 1], [], []>} : vector<8x128xf32>, vector<128x32xf32>, vector<8x32xf32> -> vector<8x32xf32>
      %c0_7 = arith.constant 0 : index
      %c0_8 = arith.constant 0 : index
      %17 = vector.load %arg10[%c0_7, %c0_8] : memref<32x32xf32, #tpu.memory_space<vmem>>, vector<32x32xf32>
      %cst_9 = arith.constant dense<0.000000e+00> : vector<8x32xf32>
      %18 = tpu.matmul %16, %17, %cst_9 {dimension_numbers = #tpu.dot_dimension_numbers<[1], [0], [0], [1], [0, 0, 1, 1], [], []>} : vector<8x32xf32>, vector<32x32xf32>, vector<8x32xf32> -> vector<8x32xf32>
      %c0_10 = arith.constant 0 : index
      %c0_11 = arith.constant 0 : index
      %19 = vector.load %arg4[%c0_10, %c0_11] : memref<8x8xf32, #tpu.memory_space<vmem>>, vector<8x8xf32>
      %c0_12 = arith.constant 0 : index
      %c0_13 = arith.constant 0 : index
      %20 = vector.load %arg11[%c0_12, %c0_13] : memref<8x32xf32, #tpu.memory_space<vmem>>, vector<8x32xf32>
      %cst_14 = arith.constant dense<0.000000e+00> : vector<8x32xf32>
      %21 = tpu.matmul %19, %20, %cst_14 {dimension_numbers = #tpu.dot_dimension_numbers<[1], [0], [0], [1], [0, 0, 1, 1], [], []>} : vector<8x8xf32>, vector<8x32xf32>, vector<8x32xf32> -> vector<8x32xf32>
      %22 = arith.addf %18, %21 : vector<8x32xf32>
      %c0_15 = arith.constant 0 : index
      %c0_16 = arith.constant 0 : index
      %23 = vector.load %arg12[%c0_15, %c0_16] : memref<1x32xf32, #tpu.memory_space<vmem>>, vector<1x32xf32>
      %24 = vector.broadcast %23 : vector<1x32xf32> to vector<8x32xf32>
      %25 = arith.addf %22, %24 : vector<8x32xf32>
      %cst_17 = arith.constant 0.000000e+00 : f32
      %26 = vector.broadcast %cst_17 : f32 to vector<8x32xf32>
      %27 = arith.cmpf oge, %25, %26 : vector<8x32xf32>
      %cst_18 = arith.constant 1.000000e-01 : f32
      %28 = vector.broadcast %cst_18 : f32 to vector<8x32xf32>
      %29 = arith.mulf %28, %25 : vector<8x32xf32>
      %30 = arith.select %27, %25, %29 : vector<8x32xi1>, vector<8x32xf32>
      %c0_19 = arith.constant 0 : index
      %c0_20 = arith.constant 0 : index
      %31 = vector.load %arg13[%c0_19, %c0_20] : memref<32x32xf32, #tpu.memory_space<vmem>>, vector<32x32xf32>
      %cst_21 = arith.constant dense<0.000000e+00> : vector<8x32xf32>
      %32 = tpu.matmul %30, %31, %cst_21 {dimension_numbers = #tpu.dot_dimension_numbers<[1], [0], [0], [1], [0, 0, 1, 1], [], []>} : vector<8x32xf32>, vector<32x32xf32>, vector<8x32xf32> -> vector<8x32xf32>
      %c0_22 = arith.constant 0 : index
      %c0_23 = arith.constant 0 : index
      %33 = vector.load %arg14[%c0_22, %c0_23] : memref<1x32xf32, #tpu.memory_space<vmem>>, vector<1x32xf32>
      %34 = vector.broadcast %33 : vector<1x32xf32> to vector<8x32xf32>
      %35 = arith.addf %32, %34 : vector<8x32xf32>
      %c0_24 = arith.constant 0 : index
      %c0_25 = arith.constant 0 : index
      %36 = vector.load %arg5[%c0_24, %c0_25] : memref<8x1xf32, #tpu.memory_space<vmem>>, vector<8x1xf32>
      %cst_26 = arith.constant 1.000000e+00 : f32
      %37 = vector.broadcast %cst_26 : f32 to vector<8x1xf32>
      %38 = arith.cmpf oeq, %36, %37 : vector<8x1xf32>
      %cst_27 = arith.constant 0.000000e+00 : f32
      %39 = vector.broadcast %cst_27 : f32 to vector<8x32xf32>
      %40 = arith.maximumf %35, %39 : vector<8x32xf32>
      %41 = vector.shape_cast %38 : vector<8x1xi1> to vector<8x1xi1>
      %42 = vector.broadcast %41 : vector<8x1xi1> to vector<8x32xi1>
      %43 = arith.select %42, %35, %40 : vector<8x32xi1>, vector<8x32xf32>
      %c0_28 = arith.constant 0 : index
      %c0_29 = arith.constant 0 : index
      %44 = vector.load %arg15[%c0_28, %c0_29] : memref<8x32xf32, #tpu.memory_space<vmem>>, vector<8x32xf32>
      tpu.vector_store %arg15[%c0_28, %c0_29], %43 {strides = array<i32>} : memref<8x32xf32, #tpu.memory_space<vmem>>, vector<8x32xf32>,
      %45 = arith.index_cast %4 : i32 to index
      %c0_30 = arith.constant 0 : index
      %46 = vector.load %arg16[%45, %c0_30] : memref<128x32xf32, #tpu.memory_space<vmem>>, vector<8x32xf32>
      tpu.vector_store %arg16[%45, %c0_30], %43 {strides = array<i32>} : memref<128x32xf32, #tpu.memory_space<vmem>>, vector<8x32xf32>,
    } else {
    }
    return
  }
  func.func @transform_0(%arg0: i32, %arg1: memref<3xi32, #tpu.memory_space<smem>>) -> (i32, i32) {
    %c1_i32 = arith.constant 1 : i32
    %0 = arith.subi %arg0, %c1_i32 : i32
    %c0_i32 = arith.constant 0 : i32
    %1 = arith.maxsi %0, %c0_i32 : i32
    %c0_i32_0 = arith.constant 0 : i32
    %c0_i32_1 = arith.constant 0 : i32
    return %1, %c0_i32_0 : i32, i32
  }
  func.func @transform_1(%arg0: i32, %arg1: memref<3xi32, #tpu.memory_space<smem>>) -> (i32, i32) {
    %c0_i32 = arith.constant 0 : i32
    %c0_i32_0 = arith.constant 0 : i32
    return %arg0, %c0_i32 : i32, i32
  }
  func.func @transform_2(%arg0: i32, %arg1: memref<3xi32, #tpu.memory_space<smem>>) -> (i32, i32) {
    %c0_i32 = arith.constant 0 : i32
    %c0_i32_0 = arith.constant 0 : i32
    return %arg0, %c0_i32 : i32, i32
  }
  func.func @transform_3(%arg0: i32, %arg1: memref<3xi32, #tpu.memory_space<smem>>) -> (i32, i32) {
    %c0_i32 = arith.constant 0 : i32
    %c0_i32_0 = arith.constant 0 : i32
    return %arg0, %c0_i32 : i32, i32
  }
  func.func @transform_4(%arg0: i32, %arg1: memref<3xi32, #tpu.memory_space<smem>>) -> (i32, i32) {
    %c0_i32 = arith.constant 0 : i32
    %c0_i32_0 = arith.constant 0 : i32
    %c0_i32_1 = arith.constant 0 : i32
    return %c0_i32, %c0_i32_0 : i32, i32
  }
  func.func @transform_5(%arg0: i32, %arg1: memref<3xi32, #tpu.memory_space<smem>>) -> (i32, i32) {
    %c0_i32 = arith.constant 0 : i32
    %c0_i32_0 = arith.constant 0 : i32
    %c0_i32_1 = arith.constant 0 : i32
    return %c0_i32, %c0_i32_0 : i32, i32
  }
  func.func @transform_6(%arg0: i32, %arg1: memref<3xi32, #tpu.memory_space<smem>>) -> (i32, i32) {
    %c0_i32 = arith.constant 0 : i32
    %c0_i32_0 = arith.constant 0 : i32
    %c0_i32_1 = arith.constant 0 : i32
    return %c0_i32, %c0_i32_0 : i32, i32
  }
  func.func @transform_7(%arg0: i32, %arg1: memref<3xi32, #tpu.memory_space<smem>>) -> (i32, i32) {
    %c0_i32 = arith.constant 0 : i32
    %c0_i32_0 = arith.constant 0 : i32
    %c0_i32_1 = arith.constant 0 : i32
    return %c0_i32, %c0_i32_0 : i32, i32
  }
  func.func @transform_8(%arg0: i32, %arg1: memref<3xi32, #tpu.memory_space<smem>>) -> (i32, i32) {
    %c0_i32 = arith.constant 0 : i32
    %c0_i32_0 = arith.constant 0 : i32
    %c0_i32_1 = arith.constant 0 : i32
    return %c0_i32, %c0_i32_0 : i32, i32
  }
  func.func @transform_9(%arg0: i32, %arg1: memref<3xi32, #tpu.memory_space<smem>>) -> (i32, i32) {
    %c0_i32 = arith.constant 0 : i32
    %c0_i32_0 = arith.constant 0 : i32
    %c0_i32_1 = arith.constant 0 : i32
    return %c0_i32, %c0_i32_0 : i32, i32
  }
  func.func @transform_10(%arg0: i32, %arg1: memref<3xi32, #tpu.memory_space<smem>>) -> (i32, i32) {
    %c0_i32 = arith.constant 0 : i32
    %c0_i32_0 = arith.constant 0 : i32
    %c0_i32_1 = arith.constant 0 : i32
    return %c0_i32, %c0_i32_0 : i32, i32
  }
  func.func @transform_11(%arg0: i32, %arg1: memref<3xi32, #tpu.memory_space<smem>>) -> (i32, i32) {
    %c0_i32 = arith.constant 0 : i32
    %c0_i32_0 = arith.constant 0 : i32
    %c0_i32_1 = arith.constant 0 : i32
    return %c0_i32, %c0_i32_0 : i32, i32
  }
  func.func @transform_12(%arg0: i32, %arg1: memref<3xi32, #tpu.memory_space<smem>>) -> (i32, i32) {
    %c0_i32 = arith.constant 0 : i32
    %c0_i32_0 = arith.constant 0 : i32
    %c0_i32_1 = arith.constant 0 : i32
    return %c0_i32, %c0_i32_0 : i32, i32
  }
  func.func @transform_13(%arg0: i32, %arg1: memref<3xi32, #tpu.memory_space<smem>>) -> (i32, i32) {
    %c0_i32 = arith.constant 0 : i32
    %c0_i32_0 = arith.constant 0 : i32
    return %arg0, %c0_i32 : i32, i32
  }
}

module attributes {stable_mosaic.version = 11 : i64} {
  func.func @out_kernel(%arg0: i32, %arg1: memref<8x32xf32, #tpu.memory_space<vmem>>, %arg2: memref<8x1xf32, #tpu.memory_space<vmem>>, %arg3: memref<1x16xf32, #tpu.memory_space<vmem>>, %arg4: memref<1x16xf32, #tpu.memory_space<vmem>>, %arg5: memref<16x32xf32, #tpu.memory_space<vmem>>, %arg6: memref<1x32xf32, #tpu.memory_space<vmem>>, %arg7: memref<32x32xf32, #tpu.memory_space<vmem>>, %arg8: memref<32x32xf32, #tpu.memory_space<vmem>>, %arg9: memref<1x32xf32, #tpu.memory_space<vmem>>, %arg10: memref<32x1xf32, #tpu.memory_space<vmem>>, %arg11: memref<1x1xf32, #tpu.memory_space<vmem>>, %arg12: memref<8x1xf32, #tpu.memory_space<vmem>>) attributes {dimension_semantics = [#tpu.dimension_semantics<parallel>], iteration_bounds = array<i64: 1>, scalar_prefetch = 0 : i64, scratch_operands = 0 : i64, tpu.core_type = #tpu.core_type<tc>, window_params = [{transform_indices = @transform_0, window_bounds = array<i64: 8, 32>}, {transform_indices = @transform_1, window_bounds = array<i64: 8, 1>}, {pipeline_mode = #tpu.pipeline_mode<synchronous>, transform_indices = @transform_2, window_bounds = array<i64: 1, 16>}, {pipeline_mode = #tpu.pipeline_mode<synchronous>, transform_indices = @transform_3, window_bounds = array<i64: 1, 16>}, {pipeline_mode = #tpu.pipeline_mode<synchronous>, transform_indices = @transform_4, window_bounds = array<i64: 16, 32>}, {pipeline_mode = #tpu.pipeline_mode<synchronous>, transform_indices = @transform_5, window_bounds = array<i64: 1, 32>}, {pipeline_mode = #tpu.pipeline_mode<synchronous>, transform_indices = @transform_6, window_bounds = array<i64: 32, 32>}, {pipeline_mode = #tpu.pipeline_mode<synchronous>, transform_indices = @transform_7, window_bounds = array<i64: 32, 32>}, {pipeline_mode = #tpu.pipeline_mode<synchronous>, transform_indices = @transform_8, window_bounds = array<i64: 1, 32>}, {pipeline_mode = #tpu.pipeline_mode<synchronous>, transform_indices = @transform_9, window_bounds = array<i64: 32, 1>}, {pipeline_mode = #tpu.pipeline_mode<synchronous>, transform_indices = @transform_10, window_bounds = array<i64: 1, 1>}, {transform_indices = @transform_11, window_bounds = array<i64: 8, 1>}]} {
    %c0 = arith.constant 0 : index
    %c0_0 = arith.constant 0 : index
    %0 = vector.load %arg2[%c0, %c0_0] : memref<8x1xf32, #tpu.memory_space<vmem>>, vector<8x1xf32>
    %c0_1 = arith.constant 0 : index
    %c0_2 = arith.constant 0 : index
    %1 = vector.load %arg3[%c0_1, %c0_2] : memref<1x16xf32, #tpu.memory_space<vmem>>, vector<1x16xf32>
    %2 = vector.broadcast %0 : vector<8x1xf32> to vector<8x16xf32>
    %3 = vector.broadcast %1 : vector<1x16xf32> to vector<8x16xf32>
    %4 = arith.mulf %2, %3 : vector<8x16xf32>
    %c0_3 = arith.constant 0 : index
    %c0_4 = arith.constant 0 : index
    %5 = vector.load %arg4[%c0_3, %c0_4] : memref<1x16xf32, #tpu.memory_space<vmem>>, vector<1x16xf32>
    %6 = vector.broadcast %5 : vector<1x16xf32> to vector<8x16xf32>
    %7 = arith.addf %4, %6 : vector<8x16xf32>
    %cst = arith.constant 0.000000e+00 : f32
    %8 = vector.broadcast %cst : f32 to vector<8x16xf32>
    %9 = arith.cmpf oge, %7, %8 : vector<8x16xf32>
    %cst_5 = arith.constant 1.000000e-01 : f32
    %10 = vector.broadcast %cst_5 : f32 to vector<8x16xf32>
    %11 = arith.mulf %10, %7 : vector<8x16xf32>
    %12 = arith.select %9, %7, %11 : vector<8x16xi1>, vector<8x16xf32>
    %c0_6 = arith.constant 0 : index
    %c0_7 = arith.constant 0 : index
    %13 = vector.load %arg5[%c0_6, %c0_7] : memref<16x32xf32, #tpu.memory_space<vmem>>, vector<16x32xf32>
    %cst_8 = arith.constant dense<0.000000e+00> : vector<8x32xf32>
    %14 = tpu.matmul %12, %13, %cst_8 {dimension_numbers = #tpu.dot_dimension_numbers<[1], [0], [0], [1], [0, 0, 1, 1], [], []>} : vector<8x16xf32>, vector<16x32xf32>, vector<8x32xf32> -> vector<8x32xf32>
    %c0_9 = arith.constant 0 : index
    %c0_10 = arith.constant 0 : index
    %15 = vector.load %arg6[%c0_9, %c0_10] : memref<1x32xf32, #tpu.memory_space<vmem>>, vector<1x32xf32>
    %16 = vector.broadcast %15 : vector<1x32xf32> to vector<8x32xf32>
    %17 = arith.addf %14, %16 : vector<8x32xf32>
    %c0_11 = arith.constant 0 : index
    %c0_12 = arith.constant 0 : index
    %18 = vector.load %arg1[%c0_11, %c0_12] : memref<8x32xf32, #tpu.memory_space<vmem>>, vector<8x32xf32>
    %c0_13 = arith.constant 0 : index
    %c0_14 = arith.constant 0 : index
    %19 = vector.load %arg7[%c0_13, %c0_14] : memref<32x32xf32, #tpu.memory_space<vmem>>, vector<32x32xf32>
    %cst_15 = arith.constant dense<0.000000e+00> : vector<8x32xf32>
    %20 = tpu.matmul %18, %19, %cst_15 {dimension_numbers = #tpu.dot_dimension_numbers<[1], [0], [0], [1], [0, 0, 1, 1], [], []>} : vector<8x32xf32>, vector<32x32xf32>, vector<8x32xf32> -> vector<8x32xf32>
    %c0_16 = arith.constant 0 : index
    %c0_17 = arith.constant 0 : index
    %21 = vector.load %arg8[%c0_16, %c0_17] : memref<32x32xf32, #tpu.memory_space<vmem>>, vector<32x32xf32>
    %cst_18 = arith.constant dense<0.000000e+00> : vector<8x32xf32>
    %22 = tpu.matmul %17, %21, %cst_18 {dimension_numbers = #tpu.dot_dimension_numbers<[1], [0], [0], [1], [0, 0, 1, 1], [], []>} : vector<8x32xf32>, vector<32x32xf32>, vector<8x32xf32> -> vector<8x32xf32>
    %23 = arith.addf %20, %22 : vector<8x32xf32>
    %c0_19 = arith.constant 0 : index
    %c0_20 = arith.constant 0 : index
    %24 = vector.load %arg9[%c0_19, %c0_20] : memref<1x32xf32, #tpu.memory_space<vmem>>, vector<1x32xf32>
    %25 = vector.broadcast %24 : vector<1x32xf32> to vector<8x32xf32>
    %26 = arith.addf %23, %25 : vector<8x32xf32>
    %cst_21 = arith.constant 0.000000e+00 : f32
    %27 = vector.broadcast %cst_21 : f32 to vector<8x32xf32>
    %28 = arith.cmpf oge, %26, %27 : vector<8x32xf32>
    %cst_22 = arith.constant 1.000000e-01 : f32
    %29 = vector.broadcast %cst_22 : f32 to vector<8x32xf32>
    %30 = arith.mulf %29, %26 : vector<8x32xf32>
    %31 = arith.select %28, %26, %30 : vector<8x32xi1>, vector<8x32xf32>
    %c0_23 = arith.constant 0 : index
    %c0_24 = arith.constant 0 : index
    %32 = vector.load %arg10[%c0_23, %c0_24] : memref<32x1xf32, #tpu.memory_space<vmem>>, vector<32x1xf32>
    %cst_25 = arith.constant dense<0.000000e+00> : vector<8x1xf32>
    %33 = tpu.matmul %31, %32, %cst_25 {dimension_numbers = #tpu.dot_dimension_numbers<[1], [0], [0], [1], [0, 0, 1, 1], [], []>} : vector<8x32xf32>, vector<32x1xf32>, vector<8x1xf32> -> vector<8x1xf32>
    %c0_26 = arith.constant 0 : index
    %c0_27 = arith.constant 0 : index
    %34 = vector.load %arg11[%c0_26, %c0_27] : memref<1x1xf32, #tpu.memory_space<vmem>>, vector<1x1xf32>
    %35 = vector.broadcast %34 : vector<1x1xf32> to vector<8x1xf32>
    %36 = arith.addf %33, %35 : vector<8x1xf32>
    %c0_28 = arith.constant 0 : index
    %c0_29 = arith.constant 0 : index
    %37 = vector.load %arg12[%c0_28, %c0_29] : memref<8x1xf32, #tpu.memory_space<vmem>>, vector<8x1xf32>
    tpu.vector_store %arg12[%c0_28, %c0_29], %36 {strides = array<i32>} : memref<8x1xf32, #tpu.memory_space<vmem>>, vector<8x1xf32>,
    return
  }
  func.func @transform_0(%arg0: i32) -> (i32, i32) {
    %c0_i32 = arith.constant 0 : i32
    %c0_i32_0 = arith.constant 0 : i32
    return %arg0, %c0_i32 : i32, i32
  }
  func.func @transform_1(%arg0: i32) -> (i32, i32) {
    %c0_i32 = arith.constant 0 : i32
    %c0_i32_0 = arith.constant 0 : i32
    return %arg0, %c0_i32 : i32, i32
  }
  func.func @transform_2(%arg0: i32) -> (i32, i32) {
    %c0_i32 = arith.constant 0 : i32
    %c0_i32_0 = arith.constant 0 : i32
    %c0_i32_1 = arith.constant 0 : i32
    return %c0_i32, %c0_i32_0 : i32, i32
  }
  func.func @transform_3(%arg0: i32) -> (i32, i32) {
    %c0_i32 = arith.constant 0 : i32
    %c0_i32_0 = arith.constant 0 : i32
    %c0_i32_1 = arith.constant 0 : i32
    return %c0_i32, %c0_i32_0 : i32, i32
  }
  func.func @transform_4(%arg0: i32) -> (i32, i32) {
    %c0_i32 = arith.constant 0 : i32
    %c0_i32_0 = arith.constant 0 : i32
    %c0_i32_1 = arith.constant 0 : i32
    return %c0_i32, %c0_i32_0 : i32, i32
  }
  func.func @transform_5(%arg0: i32) -> (i32, i32) {
    %c0_i32 = arith.constant 0 : i32
    %c0_i32_0 = arith.constant 0 : i32
    %c0_i32_1 = arith.constant 0 : i32
    return %c0_i32, %c0_i32_0 : i32, i32
  }
  func.func @transform_6(%arg0: i32) -> (i32, i32) {
    %c0_i32 = arith.constant 0 : i32
    %c0_i32_0 = arith.constant 0 : i32
    %c0_i32_1 = arith.constant 0 : i32
    return %c0_i32, %c0_i32_0 : i32, i32
  }
  func.func @transform_7(%arg0: i32) -> (i32, i32) {
    %c0_i32 = arith.constant 0 : i32
    %c0_i32_0 = arith.constant 0 : i32
    %c0_i32_1 = arith.constant 0 : i32
    return %c0_i32, %c0_i32_0 : i32, i32
  }
  func.func @transform_8(%arg0: i32) -> (i32, i32) {
    %c0_i32 = arith.constant 0 : i32
    %c0_i32_0 = arith.constant 0 : i32
    %c0_i32_1 = arith.constant 0 : i32
    return %c0_i32, %c0_i32_0 : i32, i32
  }
  func.func @transform_9(%arg0: i32) -> (i32, i32) {
    %c0_i32 = arith.constant 0 : i32
    %c0_i32_0 = arith.constant 0 : i32
    %c0_i32_1 = arith.constant 0 : i32
    return %c0_i32, %c0_i32_0 : i32, i32
  }
  func.func @transform_10(%arg0: i32) -> (i32, i32) {
    %c0_i32 = arith.constant 0 : i32
    %c0_i32_0 = arith.constant 0 : i32
    %c0_i32_1 = arith.constant 0 : i32
    return %c0_i32, %c0_i32_0 : i32, i32
  }
  func.func @transform_11(%arg0: i32) -> (i32, i32) {
    %c0_i32 = arith.constant 0 : i32
    %c0_i32_0 = arith.constant 0 : i32
    return %arg0, %c0_i32 : i32, i32
  }
}

</mosaic_0001>

<llo_original>
// kernel: _forward_jit.3
$region0: #{_forward_jit.3}
  #allocation0 [shape = 'u32[]', space=smem, size = 0x4, offset = 0x4, fixed_abs, tag = 'smem constant byte address 0x4 - core index']
  #allocation1 [shape = 'u32[72,128]{1,0:T(1,128)}', space=vmem, size = 0x9000, scoped, tag = 'internal scratch']
  #allocation2 [shape = 'f32[1,1]{1,0:T(1,128)S(1)}', space=vmem, size = 0x200, scoped, tag = 'scoped memory for _forward_jit.3']
  %s0 = inlined_call_operand.vmem [shape: f32[8,32], index: 0, kind: input, shape index: {}]
  %s1 = inlined_call_operand.vmem [shape: f32[8,1], index: 1, kind: input, shape index: {}]
  %s2 = inlined_call_operand.vmem [shape: f32[1,16], index: 2, kind: input, shape index: {}]
  %s3 = inlined_call_operand.vmem [shape: f32[1,16], index: 3, kind: input, shape index: {}]
  %s4 = inlined_call_operand.vmem [shape: f32[16,32], index: 4, kind: input, shape index: {}]
  %s5 = inlined_call_operand.vmem [shape: f32[1,32], index: 5, kind: input, shape index: {}]
  %s6 = inlined_call_operand.vmem [shape: f32[32,32], index: 6, kind: input, shape index: {}]
  %s7 = inlined_call_operand.vmem [shape: f32[32,32], index: 7, kind: input, shape index: {}]
  %s8 = inlined_call_operand.vmem [shape: f32[1,32], index: 8, kind: input, shape index: {}]
  %s9 = inlined_call_operand.vmem [shape: f32[32,1], index: 9, kind: input, shape index: {}]
  %s10 = inlined_call_operand.<no memory space> [shape: f32[1,1], index: 10, kind: input, shape index: {}]
  %s11 = inlined_call_operand.vmem [shape: f32[8,1], index: 11, kind: output, shape index: {}]
  %s12 = sld [smem:[#allocation0]]
  $region54: #{_forward_jit.3} parent=0
    _
  %s14 = ssub.s32 1, %s12
  %s15 = scalar_select 0, %s14, %s12
  %v16 = vstv %s10
  %17 = vst [vmem:[#allocation2] sm:$0x1] %v16
  // Predicated region
  $region2: #{_forward_jit.3} parent=0 // pred_check
    _
  $region3: #{_forward_jit.3} parent=0 // pred_check_branch
    %19 = sbr.rel (0) target = $region5
  $region4: #{_forward_jit.3} parent=0 // pred_region
    _
  $region5: #{_forward_jit.3} parent=0 // pred_fallthru
    _
  // Predicated region
  $region6: #{_forward_jit.3} parent=0 // pred_check
    _
  $region7: #{_forward_jit.3} parent=0 // pred_check_branch
    %21 = sbr.rel (0) target = $region9
  $region8: #{_forward_jit.3} parent=0 // pred_region
    _
  $region9: #{_forward_jit.3} parent=0 // pred_fallthru
    _
  // Predicated region
  $region10: #{_forward_jit.3} parent=0 // pred_check
    _
  $region11: #{_forward_jit.3} parent=0 // pred_check_branch
    %23 = sbr.rel (0) target = $region13
  $region12: #{_forward_jit.3} parent=0 // pred_region
    _
  $region13: #{_forward_jit.3} parent=0 // pred_fallthru
    _
  // Predicated region
  $region14: #{_forward_jit.3} parent=0 // pred_check
    _
  $region15: #{_forward_jit.3} parent=0 // pred_check_branch
    %25 = sbr.rel (0) target = $region17
  $region16: #{_forward_jit.3} parent=0 // pred_region
    _
  $region17: #{_forward_jit.3} parent=0 // pred_fallthru
    _
  // Predicated region
  $region18: #{_forward_jit.3} parent=0 // pred_check
    _
  $region19: #{_forward_jit.3} parent=0 // pred_check_branch
    %27 = sbr.rel (0) target = $region21
  $region20: #{_forward_jit.3} parent=0 // pred_region
    _
  $region21: #{_forward_jit.3} parent=0 // pred_fallthru
    _
  // Predicated region
  $region22: #{_forward_jit.3} parent=0 // pred_check
    _
  $region23: #{_forward_jit.3} parent=0 // pred_check_branch
    %29 = sbr.rel (0) target = $region25
  $region24: #{_forward_jit.3} parent=0 // pred_region
    _
  $region25: #{_forward_jit.3} parent=0 // pred_fallthru
    _
  // Predicated region
  $region26: #{_forward_jit.3} parent=0 // pred_check
    _
  $region27: #{_forward_jit.3} parent=0 // pred_check_branch
    %31 = sbr.rel (0) target = $region29
  $region28: #{_forward_jit.3} parent=0 // pred_region
    _
  $region29: #{_forward_jit.3} parent=0 // pred_fallthru
    _
  // Predicated region
  $region30: #{_forward_jit.3} parent=0 // pred_check
    _
  $region31: #{_forward_jit.3} parent=0 // pred_check_branch
    %33 = sbr.rel (0) target = $region33
  $region32: #{_forward_jit.3} parent=0 // pred_region
    _
  $region33: #{_forward_jit.3} parent=0 // pred_fallthru
    _
  // Predicated region
  $region34: #{_forward_jit.3} parent=0 // pred_check
    _
  $region35: #{_forward_jit.3} parent=0 // pred_check_branch
    %35 = sbr.rel (0) target = $region37
  $region36: #{_forward_jit.3} parent=0 // pred_region
    _
  $region37: #{_forward_jit.3} parent=0 // pred_fallthru
    _
  // Predicated region
  $region38: #{_forward_jit.3} parent=0 // pred_check
    _
  $region39: #{_forward_jit.3} parent=0 // pred_check_branch
    %37 = sbr.rel (0) target = $region41
  $region40: #{_forward_jit.3} parent=0 // pred_region
    _
  $region41: #{_forward_jit.3} parent=0 // pred_fallthru
    _
  // Predicated region
  $region42: #{_forward_jit.3} parent=0 // pred_check
    _
  $region43: #{_forward_jit.3} parent=0 // pred_check_branch
    %39 = sbr.rel (0) target = $region45
  $region44: #{_forward_jit.3} parent=0 // pred_region
    _
  $region45: #{_forward_jit.3} parent=0 // pred_fallthru
    _
  %v40 = vld [vmem:[%s1] sm:$0xff]
  %v41 = vld [vmem:[%s2] sm:$0x1]
  %43 = vset.pattern.permute.xlu0 0
  %44 = vperm.xlu0 %43, %v40
  %v45 = vpop.permute.xlu0 %44
  %v48 = vperm.slane %v41, 0
  %v50 = vmul.f32 %v45, %v48
  %v51 = vld [vmem:[%s3] sm:$0x1]
  %v53 = vperm.slane %v51, 0
  %v55 = vadd.f32 %v50, %v53
  %vm56 = vcmp.ge.f32.partialorder %v55, 0.0
  %v57 = vmul.f32 %v55, 0.1
  %v58 = vsel %vm56, %v55, %v57
  %v59 = vld [vmem:[%s4] sm:$0xff]
  %v60 = vld [vmem:[%s4 + $0x8] sm:$0xff]
  %v61 = vld [vmem:[%s5] sm:$0x1]
  %v63 = vperm.slane %v61, 0
  %vm65 = vcmask 130048
  %v67 = vsel %vm65, %v58, 0
  %69 = vmatpush.msra.mxu0 0.0
  %70 = vmatpush.msra.mxu0 0.0
  %71 = vmatpush.msra.mxu0 0.0
  %72 = vmatpush.msra.mxu0 0.0
  %73 = vmatpush.msra.mxu0 0.0
  %74 = vmatpush.msra.mxu0 0.0
  %75 = vmatpush.msra.mxu0 0.0
  %76 = vmatpush.msra.mxu0 0.0
  %77 = vmatpush.msra.mxu0 0.0
  %78 = vmatpush.msra.mxu0 0.0
  %79 = vmatpush.msra.mxu0 0.0
  %80 = vmatpush.msra.mxu0 0.0
  %81 = vmatpush.msra.mxu0 0.0
  %82 = vmatpush.msra.mxu0 0.0
  %83 = vmatpush.msra.mxu0 %v60
  %84 = vmatpush.msra.mxu0 %v59
  %85 = vmatmul.f32.gmra.mxu0 %v67
  %v86 = vpop.f32.mrf.mxu0
  %v87 = vadd.f32 %v63, %v86
  %88 = vdwg.mxu0
  %v89 = vld [vmem:[%s0] sm:$0xff]
  %v90 = vld [vmem:[%s6] sm:$0xff]
  %v91 = vld [vmem:[%s6 + $0x8] sm:$0xff]
  %v92 = vld [vmem:[%s6 + $0x10] sm:$0xff]
  %v93 = vld [vmem:[%s6 + $0x18] sm:$0xff]
  %v94 = vld [vmem:[%s7] sm:$0xff]
  %v95 = vld [vmem:[%s7 + $0x8] sm:$0xff]
  %v96 = vld [vmem:[%s7 + $0x10] sm:$0xff]
  %v97 = vld [vmem:[%s7 + $0x18] sm:$0xff]
  %vm98 = vcmask 261120
  %v100 = vsel %vm98, %v87, 0
  %102 = vmatpush.msra.mxu0 0.0
  %103 = vmatpush.msra.mxu0 0.0
  %104 = vmatpush.msra.mxu0 0.0
  %105 = vmatpush.msra.mxu0 0.0
  %106 = vmatpush.msra.mxu0 0.0
  %107 = vmatpush.msra.mxu0 0.0
  %108 = vmatpush.msra.mxu0 0.0
  %109 = vmatpush.msra.mxu0 0.0
  %110 = vmatpush.msra.mxu0 0.0
  %111 = vmatpush.msra.mxu0 0.0
  %112 = vmatpush.msra.mxu0 0.0
  %113 = vmatpush.msra.mxu0 0.0
  %114 = vmatpush.msra.mxu0 %v97
  %115 = vmatpush.msra.mxu0 %v96
  %116 = vmatpush.msra.mxu0 %v95
  %117 = vmatpush.msra.mxu0 %v94
  %118 = vmatmul.f32.gmra.mxu0 %v100
  %v119 = vpop.f32.mrf.mxu0
  %v120 = vadd.f32 0.0, %v119
  %121 = vdwg.mxu0
  %v123 = vsel %vm98, %v89, 0
  %125 = vmatpush.msra.mxu0 0.0
  %126 = vmatpush.msra.mxu0 0.0
  %127 = vmatpush.msra.mxu0 0.0
  %128 = vmatpush.msra.mxu0 0.0
  %129 = vmatpush.msra.mxu0 0.0
  %130 = vmatpush.msra.mxu0 0.0
  %131 = vmatpush.msra.mxu0 0.0
  %132 = vmatpush.msra.mxu0 0.0
  %133 = vmatpush.msra.mxu0 0.0
  %134 = vmatpush.msra.mxu0 0.0
  %135 = vmatpush.msra.mxu0 0.0
  %136 = vmatpush.msra.mxu0 0.0
  %137 = vmatpush.msra.mxu0 %v93
  %138 = vmatpush.msra.mxu0 %v92
  %139 = vmatpush.msra.mxu0 %v91
  %140 = vmatpush.msra.mxu0 %v90
  %141 = vmatmul.f32.gmra.mxu0 %v123
  %v142 = vpop.f32.mrf.mxu0
  %v143 = vadd.f32 %v120, %v142
  %144 = vdwg.mxu0
  %v145 = vld [vmem:[%s8] sm:$0x1]
  %v147 = vperm.slane %v145, 0
  %v149 = vadd.f32 %v143, %v147
  %vm150 = vcmp.ge.f32.partialorder %v149, 0.0
  %v151 = vmul.f32 %v149, 0.1
  %v152 = vsel %vm150, %v149, %v151
  %v153 = vld [vmem:[%s9] sm:$0xff]
  %v154 = vld [vmem:[%s9 + $0x8] sm:$0xff]
  %v155 = vld [vmem:[%s9 + $0x10] sm:$0xff]
  %v156 = vld [vmem:[%s9 + $0x18] sm:$0xff]
  %v157 = vld [vmem:[#allocation2] sm:$0x1]
  %v159 = vperm.slane %v157, 0
  %v162 = vsel %vm98, %v152, 0
  %164 = vmatpush.msra.mxu0 0.0
  %165 = vmatpush.msra.mxu0 0.0
  %166 = vmatpush.msra.mxu0 0.0
  %167 = vmatpush.msra.mxu0 0.0
  %168 = vmatpush.msra.mxu0 0.0
  %169 = vmatpush.msra.mxu0 0.0
  %170 = vmatpush.msra.mxu0 0.0
  %171 = vmatpush.msra.mxu0 0.0
  %172 = vmatpush.msra.mxu0 0.0
  %173 = vmatpush.msra.mxu0 0.0
  %174 = vmatpush.msra.mxu0 0.0
  %175 = vmatpush.msra.mxu0 0.0
  %176 = vmatpush.msra.mxu0 %v156
  %177 = vmatpush.msra.mxu0 %v155
  %178 = vmatpush.msra.mxu0 %v154
  %179 = vmatpush.msra.mxu0 %v153
  %180 = vmatmul.f32.gmra.mxu0 %v162
  %v181 = vpop.f32.mrf.mxu0
  %v182 = vadd.f32 %v159, %v181
  %183 = vdwg.mxu0
  %vm184 = vcmask 7168
  %185 = vst.msk [vmem:[%s11] sm:$0xff] %vm184, %v182
  // Predicated region
  $region46: #{_forward_jit.3} parent=0 // pred_check
    _
  $region47: #{_forward_jit.3} parent=0 // pred_check_branch
    %187 = sbr.rel (0) target = $region49
  $region48: #{_forward_jit.3} parent=0 // pred_region
    _
  $region49: #{_forward_jit.3} parent=0 // pred_fallthru
    _
  // Predicated region
  $region50: #{_forward_jit.3} parent=0 // pred_check
    _
  $region51: #{_forward_jit.3} parent=0 // pred_check_branch
    %189 = sbr.rel (0) target = $region53
  $region52: #{_forward_jit.3} parent=0 // pred_region
    _
  $region53: #{_forward_jit.3} parent=0 // pred_fallthru
    _

// kernel: _forward_jit.2
$region0: #{_forward_jit.2}
  #allocation0 [shape = 'u32[]', space=smem, size = 0x4, offset = 0x4, fixed_abs, tag = 'smem constant byte address 0x4 - core index']
  #allocation1 [shape = 'u32[72,128]{1,0:T(1,128)}', space=vmem, size = 0x9000, scoped, tag = 'internal scratch']
  #allocation2 [shape = 'f32[128,32]{1,0:T(8,128)}', space=vmem, size = 0x10000, scoped, tag = 'scratch operand']
  #allocation3 [shape = 's32[1]{0}', space=sflag, size = 0x4, scoped, tag = 'scoped memory for _forward_jit.2']
  #allocation4 [shape = 'u8[512]{0}', space=smem, size = 0x200, scoped, tag = 'prefetched SMEM operand 0']
  %s0 = inlined_call_operand.vmem [shape: s32[3], index: 0, kind: input, shape index: {}]
  %s1 = inlined_call_operand.vmem [shape: bf16[16,128], index: 1, kind: input, shape index: {}]
  %s2 = inlined_call_operand.vmem [shape: f32[24,1], index: 2, kind: input, shape index: {}]
  %s3 = inlined_call_operand.vmem [shape: f32[24,8], index: 3, kind: input, shape index: {}]
  %s4 = inlined_call_operand.vmem [shape: f32[24,1], index: 4, kind: input, shape index: {}]
  %s5 = inlined_call_operand.vmem [shape: f32[1,16], index: 5, kind: input, shape index: {}]
  %s6 = inlined_call_operand.vmem [shape: f32[1,16], index: 6, kind: input, shape index: {}]
  %s7 = inlined_call_operand.vmem [shape: f32[16,32], index: 7, kind: input, shape index: {}]
  %s8 = inlined_call_operand.vmem [shape: f32[1,32], index: 8, kind: input, shape index: {}]
  %s9 = inlined_call_operand.vmem [shape: f32[32,32], index: 9, kind: input, shape index: {}]
  %s10 = inlined_call_operand.vmem [shape: f32[8,32], index: 10, kind: input, shape index: {}]
  %s11 = inlined_call_operand.vmem [shape: f32[1,32], index: 11, kind: input, shape index: {}]
  %s12 = inlined_call_operand.vmem [shape: f32[32,32], index: 12, kind: input, shape index: {}]
  %s13 = inlined_call_operand.vmem [shape: f32[1,32], index: 13, kind: input, shape index: {}]
  %s14 = inlined_call_operand.vmem [shape: f32[24,32], index: 14, kind: output, shape index: {}]
  %s15 = sld [smem:[#allocation0]]
  $region97: #{_forward_jit.2} parent=0
    _
  %s17 = ssub.s32 1, %s15
  %s18 = scalar_select 0, %s17, %s15
  %s20 = sshll.u32 %s0, 4
  %s21 = int_to_ptr.vmem [resolvable:$true] %s20
  %23 = dma.vmem_to_smem %s21, 16, [#allocation4], [#allocation3]
  %25 = dma.done [#allocation3], 16
  %26 = sfence
  loop: start=0, step=1, limit=5
  $region2: #{_forward_jit.2} parent=0 // loop_pre_header
    _
  $region3: #{_forward_jit.2} parent=0 // loop_header
    %s28 = sphi 0, %s32
    %p29 = scmp.ge.s32.totalorder %s28, 5
    %s44 = sphi 0, %s46
    %s47 = sphi 0, %s44
    %s48 = sphi 0, %s47
    %s64 = sphi 0, %s48
    %s70 = sphi 0, %s72
    %s73 = sphi 0, %s70
    %s74 = sphi 0, %s73
    %s90 = sphi 0, %s74
    %s96 = sphi 0, %s98
    %s99 = sphi 0, %s96
    %s100 = sphi 0, %s99
    %s116 = sphi 0, %s100
    %s122 = sphi 0, %s124
    %s125 = sphi 0, %s122
    %s126 = sphi 0, %s125
    %s142 = sphi 0, %s126
    %s146 = sphi 0, %s146
    %s148 = sphi 0, %s146
    %s149 = sphi 0, %s148
    %s163 = sphi 0, %s149
    %s167 = sphi 0, %s167
    %s169 = sphi 0, %s167
    %s170 = sphi 0, %s169
    %s184 = sphi 0, %s170
    %s188 = sphi 0, %s188
    %s190 = sphi 0, %s188
    %s191 = sphi 0, %s190
    %s205 = sphi 0, %s191
    %s209 = sphi 0, %s209
    %s211 = sphi 0, %s209
    %s212 = sphi 0, %s211
    %s226 = sphi 0, %s212
    %s230 = sphi 0, %s230
    %s232 = sphi 0, %s230
    %s233 = sphi 0, %s232
    %s247 = sphi 0, %s233
    %s251 = sphi 0, %s251
    %s253 = sphi 0, %s251
    %s254 = sphi 0, %s253
    %s268 = sphi 0, %s254
    %s272 = sphi 0, %s272
    %s274 = sphi 0, %s272
    %s275 = sphi 0, %s274
    %s289 = sphi 0, %s275
    %s293 = sphi 0, %s293
    %s295 = sphi 0, %s293
    %s296 = sphi 0, %s295
    %s310 = sphi 0, %s296
    %s314 = sphi 0, %s314
    %s316 = sphi 0, %s314
    %s317 = sphi 0, %s316
    %s331 = sphi 0, %s317
    %s337 = sphi 0, %s339
    %s340 = sphi 0, %s337
    %s341 = sphi 0, %s340
    %s357 = sphi 0, %s341
  $region4: #{_forward_jit.2} parent=0 // loop_header_branch
    %31 = sbr.rel (%p29) target = $region8
  $region5: #{_forward_jit.2} parent=0 // loop_body
    %s33 = ssub.s32 %s28, 1
    %s34 = ssub.s32 %s28, 2
    %s35 = sadd.s32 %s28, 1
    %s36 = ssub.s32 %s28, 1
    %p37 = scmp.gt.s32.totalorder %s36, 0
    %s38 = scalar_select %p37, %s36, 0
    %s39 = ssub.s32 %s35, 1
    %p40 = scmp.gt.s32.totalorder %s39, 0
    %s41 = scalar_select %p40, %s39, 0
    %s42 = ssub.s32 %s38, %s41
    %p43 = scmp.eq.s32.totalorder %s42, 0
    %s45 = sadd.s32 %s44, 1
    %s46 = scalar_select %p43, %s44, %s45
    %p49 = pneg %p43
    %p50 = scmp.eq.s32.totalorder %s28, 2
    %p51 = por %p49, %p50
    %p52 = scmp.ne.s32.totalorder %s44, %s47
    %p53 = scmp.eq.s32.totalorder %s28, 0
    %p54 = por %p52, %p53
    %p55 = scmp.ne.s32.totalorder %s44, %s47
    %p56 = scmp.eq.s32.totalorder %s33, 2
    %p57 = por %p55, %p56
    %p58 = scmp.ne.s32.totalorder %s47, %s48
    %p59 = scmp.eq.s32.totalorder %s33, 0
    %p60 = por %p58, %p59
    %p61 = scmp.ne.s32.totalorder %s47, %s48
    %p62 = scmp.eq.s32.totalorder %s34, 2
    %p63 = por %p61, %p62
    %p65 = scmp.ne.s32.totalorder %s48, %s64
    %p66 = scmp.eq.s32.totalorder %s34, 0
    %p67 = por %p65, %p66
    %s68 = ssub.s32 %s28, %s35
    %p69 = scmp.eq.s32.totalorder %s68, 0
    %s71 = sadd.s32 %s70, 1
    %s72 = scalar_select %p69, %s70, %s71
    %p75 = pneg %p69
    %p76 = scmp.eq.s32.totalorder %s28, 2
    %p77 = por %p75, %p76
    %p78 = scmp.ne.s32.totalorder %s70, %s73
    %p79 = scmp.eq.s32.totalorder %s28, 0
    %p80 = por %p78, %p79
    %p81 = scmp.ne.s32.totalorder %s70, %s73
    %p82 = scmp.eq.s32.totalorder %s33, 2
    %p83 = por %p81, %p82
    %p84 = scmp.ne.s32.totalorder %s73, %s74
    %p85 = scmp.eq.s32.totalorder %s33, 0
    %p86 = por %p84, %p85
    %p87 = scmp.ne.s32.totalorder %s73, %s74
    %p88 = scmp.eq.s32.totalorder %s34, 2
    %p89 = por %p87, %p88
    %p91 = scmp.ne.s32.totalorder %s74, %s90
    %p92 = scmp.eq.s32.totalorder %s34, 0
    %p93 = por %p91, %p92
    %s94 = ssub.s32 %s28, %s35
    %p95 = scmp.eq.s32.totalorder %s94, 0
    %s97 = sadd.s32 %s96, 1
    %s98 = scalar_select %p95, %s96, %s97
    %p101 = pneg %p95
    %p102 = scmp.eq.s32.totalorder %s28, 2
    %p103 = por %p101, %p102
    %p104 = scmp.ne.s32.totalorder %s96, %s99
    %p105 = scmp.eq.s32.totalorder %s28, 0
    %p106 = por %p104, %p105
    %p107 = scmp.ne.s32.totalorder %s96, %s99
    %p108 = scmp.eq.s32.totalorder %s33, 2
    %p109 = por %p107, %p108
    %p110 = scmp.ne.s32.totalorder %s99, %s100
    %p111 = scmp.eq.s32.totalorder %s33, 0
    %p112 = por %p110, %p111
    %p113 = scmp.ne.s32.totalorder %s99, %s100
    %p114 = scmp.eq.s32.totalorder %s34, 2
    %p115 = por %p113, %p114
    %p117 = scmp.ne.s32.totalorder %s100, %s116
    %p118 = scmp.eq.s32.totalorder %s34, 0
    %p119 = por %p117, %p118
    %s120 = ssub.s32 %s28, %s35
    %p121 = scmp.eq.s32.totalorder %s120, 0
    %s123 = sadd.s32 %s122, 1
    %s124 = scalar_select %p121, %s122, %s123
    %p127 = pneg %p121
    %p128 = scmp.eq.s32.totalorder %s28, 2
    %p129 = por %p127, %p128
    %p130 = scmp.ne.s32.totalorder %s122, %s125
    %p131 = scmp.eq.s32.totalorder %s28, 0
    %p132 = por %p130, %p131
    %p133 = scmp.ne.s32.totalorder %s122, %s125
    %p134 = scmp.eq.s32.totalorder %s33, 2
    %p135 = por %p133, %p134
    %p136 = scmp.ne.s32.totalorder %s125, %s126
    %p137 = scmp.eq.s32.totalorder %s33, 0
    %p138 = por %p136, %p137
    %p139 = scmp.ne.s32.totalorder %s125, %s126
    %p140 = scmp.eq.s32.totalorder %s34, 2
    %p141 = por %p139, %p140
    %p143 = scmp.ne.s32.totalorder %s126, %s142
    %p144 = scmp.eq.s32.totalorder %s34, 0
    %p145 = por %p143, %p144
    %s147 = sadd.s32 %s146, 1
    %p150 = scmp.eq.s32.totalorder %s28, 2
    %p151 = scmp.ne.s32.totalorder %s146, %s148
    %p152 = scmp.eq.s32.totalorder %s28, 0
    %p153 = por %p151, %p152
    %p154 = scmp.ne.s32.totalorder %s146, %s148
    %p155 = scmp.eq.s32.totalorder %s33, 2
    %p156 = por %p154, %p155
    %p157 = scmp.ne.s32.totalorder %s148, %s149
    %p158 = scmp.eq.s32.totalorder %s33, 0
    %p159 = por %p157, %p158
    %p160 = scmp.ne.s32.totalorder %s148, %s149
    %p161 = scmp.eq.s32.totalorder %s34, 2
    %p162 = por %p160, %p161
    %p164 = scmp.ne.s32.totalorder %s149, %s163
    %p165 = scmp.eq.s32.totalorder %s34, 0
    %p166 = por %p164, %p165
    %s168 = sadd.s32 %s167, 1
    %p171 = scmp.eq.s32.totalorder %s28, 2
    %p172 = scmp.ne.s32.totalorder %s167, %s169
    %p173 = scmp.eq.s32.totalorder %s28, 0
    %p174 = por %p172, %p173
    %p175 = scmp.ne.s32.totalorder %s167, %s169
    %p176 = scmp.eq.s32.totalorder %s33, 2
    %p177 = por %p175, %p176
    %p178 = scmp.ne.s32.totalorder %s169, %s170
    %p179 = scmp.eq.s32.totalorder %s33, 0
    %p180 = por %p178, %p179
    %p181 = scmp.ne.s32.totalorder %s169, %s170
    %p182 = scmp.eq.s32.totalorder %s34, 2
    %p183 = por %p181, %p182
    %p185 = scmp.ne.s32.totalorder %s170, %s184
    %p186 = scmp.eq.s32.totalorder %s34, 0
    %p187 = por %p185, %p186
    %s189 = sadd.s32 %s188, 1
    %p192 = scmp.eq.s32.totalorder %s28, 2
    %p193 = scmp.ne.s32.totalorder %s188, %s190
    %p194 = scmp.eq.s32.totalorder %s28, 0
    %p195 = por %p193, %p194
    %p196 = scmp.ne.s32.totalorder %s188, %s190
    %p197 = scmp.eq.s32.totalorder %s33, 2
    %p198 = por %p196, %p197
    %p199 = scmp.ne.s32.totalorder %s190, %s191
    %p200 = scmp.eq.s32.totalorder %s33, 0
    %p201 = por %p199, %p200
    %p202 = scmp.ne.s32.totalorder %s190, %s191
    %p203 = scmp.eq.s32.totalorder %s34, 2
    %p204 = por %p202, %p203
    %p206 = scmp.ne.s32.totalorder %s191, %s205
    %p207 = scmp.eq.s32.totalorder %s34, 0
    %p208 = por %p206, %p207
    %s210 = sadd.s32 %s209, 1
    %p213 = scmp.eq.s32.totalorder %s28, 2
    %p214 = scmp.ne.s32.totalorder %s209, %s211
    %p215 = scmp.eq.s32.totalorder %s28, 0
    %p216 = por %p214, %p215
    %p217 = scmp.ne.s32.totalorder %s209, %s211
    %p218 = scmp.eq.s32.totalorder %s33, 2
    %p219 = por %p217, %p218
    %p220 = scmp.ne.s32.totalorder %s211, %s212
    %p221 = scmp.eq.s32.totalorder %s33, 0
    %p222 = por %p220, %p221
    %p223 = scmp.ne.s32.totalorder %s211, %s212
    %p224 = scmp.eq.s32.totalorder %s34, 2
    %p225 = por %p223, %p224
    %p227 = scmp.ne.s32.totalorder %s212, %s226
    %p228 = scmp.eq.s32.totalorder %s34, 0
    %p229 = por %p227, %p228
    %s231 = sadd.s32 %s230, 1
    %p234 = scmp.eq.s32.totalorder %s28, 2
    %p235 = scmp.ne.s32.totalorder %s230, %s232
    %p236 = scmp.eq.s32.totalorder %s28, 0
    %p237 = por %p235, %p236
    %p238 = scmp.ne.s32.totalorder %s230, %s232
    %p239 = scmp.eq.s32.totalorder %s33, 2
    %p240 = por %p238, %p239
    %p241 = scmp.ne.s32.totalorder %s232, %s233
    %p242 = scmp.eq.s32.totalorder %s33, 0
    %p243 = por %p241, %p242
    %p244 = scmp.ne.s32.totalorder %s232, %s233
    %p245 = scmp.eq.s32.totalorder %s34, 2
    %p246 = por %p244, %p245
    %p248 = scmp.ne.s32.totalorder %s233, %s247
    %p249 = scmp.eq.s32.totalorder %s34, 0
    %p250 = por %p248, %p249
    %s252 = sadd.s32 %s251, 1
    %p255 = scmp.eq.s32.totalorder %s28, 2
    %p256 = scmp.ne.s32.totalorder %s251, %s253
    %p257 = scmp.eq.s32.totalorder %s28, 0
    %p258 = por %p256, %p257
    %p259 = scmp.ne.s32.totalorder %s251, %s253
    %p260 = scmp.eq.s32.totalorder %s33, 2
    %p261 = por %p259, %p260
    %p262 = scmp.ne.s32.totalorder %s253, %s254
    %p263 = scmp.eq.s32.totalorder %s33, 0
    %p264 = por %p262, %p263
    %p265 = scmp.ne.s32.totalorder %s253, %s254
    %p266 = scmp.eq.s32.totalorder %s34, 2
    %p267 = por %p265, %p266
    %p269 = scmp.ne.s32.totalorder %s254, %s268
    %p270 = scmp.eq.s32.totalorder %s34, 0
    %p271 = por %p269, %p270
    %s273 = sadd.s32 %s272, 1
    %p276 = scmp.eq.s32.totalorder %s28, 2
    %p277 = scmp.ne.s32.totalorder %s272, %s274
    %p278 = scmp.eq.s32.totalorder %s28, 0
    %p279 = por %p277, %p278
    %p280 = scmp.ne.s32.totalorder %s272, %s274
    %p281 = scmp.eq.s32.totalorder %s33, 2
    %p282 = por %p280, %p281
    %p283 = scmp.ne.s32.totalorder %s274, %s275
    %p284 = scmp.eq.s32.totalorder %s33, 0
    %p285 = por %p283, %p284
    %p286 = scmp.ne.s32.totalorder %s274, %s275
    %p287 = scmp.eq.s32.totalorder %s34, 2
    %p288 = por %p286, %p287
    %p290 = scmp.ne.s32.totalorder %s275, %s289
    %p291 = scmp.eq.s32.totalorder %s34, 0
    %p292 = por %p290, %p291
    %s294 = sadd.s32 %s293, 1
    %p297 = scmp.eq.s32.totalorder %s28, 2
    %p298 = scmp.ne.s32.totalorder %s293, %s295
    %p299 = scmp.eq.s32.totalorder %s28, 0
    %p300 = por %p298, %p299
    %p301 = scmp.ne.s32.totalorder %s293, %s295
    %p302 = scmp.eq.s32.totalorder %s33, 2
    %p303 = por %p301, %p302
    %p304 = scmp.ne.s32.totalorder %s295, %s296
    %p305 = scmp.eq.s32.totalorder %s33, 0
    %p306 = por %p304, %p305
    %p307 = scmp.ne.s32.totalorder %s295, %s296
    %p308 = scmp.eq.s32.totalorder %s34, 2
    %p309 = por %p307, %p308
    %p311 = scmp.ne.s32.totalorder %s296, %s310
    %p312 = scmp.eq.s32.totalorder %s34, 0
    %p313 = por %p311, %p312
    %s315 = sadd.s32 %s314, 1
    %p318 = scmp.eq.s32.totalorder %s28, 2
    %p319 = scmp.ne.s32.totalorder %s314, %s316
    %p320 = scmp.eq.s32.totalorder %s28, 0
    %p321 = por %p319, %p320
    %p322 = scmp.ne.s32.totalorder %s314, %s316
    %p323 = scmp.eq.s32.totalorder %s33, 2
    %p324 = por %p322, %p323
    %p325 = scmp.ne.s32.totalorder %s316, %s317
    %p326 = scmp.eq.s32.totalorder %s33, 0
    %p327 = por %p325, %p326
    %p328 = scmp.ne.s32.totalorder %s316, %s317
    %p329 = scmp.eq.s32.totalorder %s34, 2
    %p330 = por %p328, %p329
    %p332 = scmp.ne.s32.totalorder %s317, %s331
    %p333 = scmp.eq.s32.totalorder %s34, 0
    %p334 = por %p332, %p333
    %s335 = ssub.s32 %s28, %s35
    %p336 = scmp.eq.s32.totalorder %s335, 0
    %s338 = sadd.s32 %s337, 1
    %s339 = scalar_select %p336, %s337, %s338
    %p342 = pneg %p336
    %p343 = scmp.eq.s32.totalorder %s28, 2
    %p344 = por %p342, %p343
    %p345 = scmp.ne.s32.totalorder %s337, %s340
    %p346 = scmp.eq.s32.totalorder %s28, 0
    %p347 = por %p345, %p346
    %p348 = scmp.ne.s32.totalorder %s337, %s340
    %p349 = scmp.eq.s32.totalorder %s33, 2
    %p350 = por %p348, %p349
    %p351 = scmp.ne.s32.totalorder %s340, %s341
    %p352 = scmp.eq.s32.totalorder %s33, 0
    %p353 = por %p351, %p352
    %p354 = scmp.ne.s32.totalorder %s340, %s341
    %p355 = scmp.eq.s32.totalorder %s34, 2
    %p356 = por %p354, %p355
    %p358 = scmp.ne.s32.totalorder %s341, %s357
    %p359 = scmp.eq.s32.totalorder %s34, 0
    %p360 = por %p358, %p359
    %p361 = scmp.le.s32.totalorder 1, %s28
    %p362 = scmp.lt.s32.totalorder %s28, 4
    %p363 = pnand %p361, %p362
    %p364 = pneg %p363
    // Predicated region
    $region9: #{_forward_jit.2} parent=5 // pred_check
      _
    $region10: #{_forward_jit.2} parent=5 // pred_check_branch
      %366 = sbr.rel (%p363) target = $region12
    $region11: #{_forward_jit.2} parent=5 // pred_region
      %s367 = ssub.s32 %s28, 1
      // Predicated region
      $region13: #{_forward_jit.2} parent=11 // pred_check
        %p368 = pneg %p159
      $region14: #{_forward_jit.2} parent=11 // pred_check_branch
        %370 = sbr.rel (%p368) target = $region16
      $region15: #{_forward_jit.2} parent=11 // pred_region
        _
      $region16: #{_forward_jit.2} parent=11 // pred_fallthru
        _
      // Predicated region
      $region17: #{_forward_jit.2} parent=11 // pred_check
        %p371 = pneg %p180
      $region18: #{_forward_jit.2} parent=11 // pred_check_branch
        %373 = sbr.rel (%p371) target = $region20
      $region19: #{_forward_jit.2} parent=11 // pred_region
        _
      $region20: #{_forward_jit.2} parent=11 // pred_fallthru
        _
      // Predicated region
      $region21: #{_forward_jit.2} parent=11 // pred_check
        %p374 = pneg %p201
      $region22: #{_forward_jit.2} parent=11 // pred_check_branch
        %376 = sbr.rel (%p374) target = $region24
      $region23: #{_forward_jit.2} parent=11 // pred_region
        _
      $region24: #{_forward_jit.2} parent=11 // pred_fallthru
        _
      // Predicated region
      $region25: #{_forward_jit.2} parent=11 // pred_check
        %p377 = pneg %p222
      $region26: #{_forward_jit.2} parent=11 // pred_check_branch
        %379 = sbr.rel (%p377) target = $region28
      $region27: #{_forward_jit.2} parent=11 // pred_region
        _
      $region28: #{_forward_jit.2} parent=11 // pred_fallthru
        _
      // Predicated region
      $region29: #{_forward_jit.2} parent=11 // pred_check
        %p380 = pneg %p243
      $region30: #{_forward_jit.2} parent=11 // pred_check_branch
        %382 = sbr.rel (%p380) target = $region32
      $region31: #{_forward_jit.2} parent=11 // pred_region
        _
      $region32: #{_forward_jit.2} parent=11 // pred_fallthru
        _
      // Predicated region
      $region33: #{_forward_jit.2} parent=11 // pred_check
        %p383 = pneg %p264
      $region34: #{_forward_jit.2} parent=11 // pred_check_branch
        %385 = sbr.rel (%p383) target = $region36
      $region35: #{_forward_jit.2} parent=11 // pred_region
        _
      $region36: #{_forward_jit.2} parent=11 // pred_fallthru
        _
      // Predicated region
      $region37: #{_forward_jit.2} parent=11 // pred_check
        %p386 = pneg %p285
      $region38: #{_forward_jit.2} parent=11 // pred_check_branch
        %388 = sbr.rel (%p386) target = $region40
      $region39: #{_forward_jit.2} parent=11 // pred_region
        _
      $region40: #{_forward_jit.2} parent=11 // pred_fallthru
        _
      // Predicated region
      $region41: #{_forward_jit.2} parent=11 // pred_check
        %p389 = pneg %p306
      $region42: #{_forward_jit.2} parent=11 // pred_check_branch
        %391 = sbr.rel (%p389) target = $region44
      $region43: #{_forward_jit.2} parent=11 // pred_region
        _
      $region44: #{_forward_jit.2} parent=11 // pred_fallthru
        _
      // Predicated region
      $region45: #{_forward_jit.2} parent=11 // pred_check
        %p392 = pneg %p327
      $region46: #{_forward_jit.2} parent=11 // pred_check_branch
        %394 = sbr.rel (%p392) target = $region48
      $region47: #{_forward_jit.2} parent=11 // pred_region
        _
      $region48: #{_forward_jit.2} parent=11 // pred_fallthru
        _
    $region12: #{_forward_jit.2} parent=5 // pred_fallthru
      _
    %p395 = scmp.lt.s32.totalorder %s28, 3
    // Predicated region
    $region49: #{_forward_jit.2} parent=5 // pred_check
      %p396 = pneg %p395
    $region50: #{_forward_jit.2} parent=5 // pred_check_branch
      %398 = sbr.rel (%p396) target = $region52
    $region51: #{_forward_jit.2} parent=5 // pred_region
      // Predicated region
      $region53: #{_forward_jit.2} parent=51 // pred_check
        %p399 = pneg %p54
      $region54: #{_forward_jit.2} parent=51 // pred_check_branch
        %401 = sbr.rel (%p399) target = $region56
      $region55: #{_forward_jit.2} parent=51 // pred_region
        %s402 = ssub.s32 %s28, 1
        %p403 = scmp.gt.s32.totalorder %s402, 0
        %s404 = scalar_select %p403, %s402, 0
        %p405 = scmp.lt.s32.totalorder %s404, 1
        %s406 = scalar_select %p405, %s404, 1
        %s407 = smul.addr %s406, 4
        %s408 = scalar_lea.vmem %s1, %s407
        %s409 = ssub.s32 %s28, 1
        %p410 = scmp.gt.s32.totalorder %s409, 0
        %s411 = scalar_select %p410, %s409, 0
      $region56: #{_forward_jit.2} parent=51 // pred_fallthru
        _
      // Predicated region
      $region57: #{_forward_jit.2} parent=51 // pred_check
        %p412 = pneg %p80
      $region58: #{_forward_jit.2} parent=51 // pred_check_branch
        %414 = sbr.rel (%p412) target = $region60
      $region59: #{_forward_jit.2} parent=51 // pred_region
        %p415 = scmp.lt.s32.totalorder %s28, 2
        %s416 = scalar_select %p415, %s28, 2
        %s417 = smul.addr %s416, 8
        %s418 = scalar_lea.vmem %s2, %s417
      $region60: #{_forward_jit.2} parent=51 // pred_fallthru
        _
      // Predicated region
      $region61: #{_forward_jit.2} parent=51 // pred_check
        %p419 = pneg %p106
      $region62: #{_forward_jit.2} parent=51 // pred_check_branch
        %421 = sbr.rel (%p419) target = $region64
      $region63: #{_forward_jit.2} parent=51 // pred_region
        %p422 = scmp.lt.s32.totalorder %s28, 2
        %s423 = scalar_select %p422, %s28, 2
        %s424 = smul.addr %s423, 8
        %s425 = scalar_lea.vmem %s3, %s424
      $region64: #{_forward_jit.2} parent=51 // pred_fallthru
        _
      // Predicated region
      $region65: #{_forward_jit.2} parent=51 // pred_check
        %p426 = pneg %p132
      $region66: #{_forward_jit.2} parent=51 // pred_check_branch
        %428 = sbr.rel (%p426) target = $region68
      $region67: #{_forward_jit.2} parent=51 // pred_region
        %p429 = scmp.lt.s32.totalorder %s28, 2
        %s430 = scalar_select %p429, %s28, 2
        %s431 = smul.addr %s430, 8
        %s432 = scalar_lea.vmem %s4, %s431
      $region68: #{_forward_jit.2} parent=51 // pred_fallthru
        _
    $region52: #{_forward_jit.2} parent=5 // pred_fallthru
      _
    %p433 = scmp.le.s32.totalorder 1, %s28
    %p434 = scmp.lt.s32.totalorder %s28, 4
    %p435 = pnand %p433, %p434
    %p436 = pneg %p435
    // Predicated region
    $region69: #{_forward_jit.2} parent=5 // pred_check
      _
    $region70: #{_forward_jit.2} parent=5 // pred_check_branch
      %438 = sbr.rel (%p435) target = $region72
    $region71: #{_forward_jit.2} parent=5 // pred_region
      %s439 = ssub.s32 %s28, 1
      %s440 = ssub.s32 %s33, 1
      %p441 = scmp.gt.s32.totalorder %s440, 0
      %s442 = scalar_select %p441, %s440, 0
      %p443 = scmp.lt.s32.totalorder %s442, 1
      %s444 = scalar_select %p443, %s442, 1
      %s445 = smul.addr %s444, 4
      %s446 = scalar_lea.vmem %s1, %s445
      %p447 = pneg %p60
      %p448 = pneg %p57
      %p449 = scmp.lt.s32.totalorder %s33, 2
      %s450 = scalar_select %p449, %s33, 2
      %s451 = smul.addr %s450, 8
      %s452 = scalar_lea.vmem %s2, %s451
      %p453 = pneg %p86
      %p454 = pneg %p83
      %p455 = scmp.lt.s32.totalorder %s33, 2
      %s456 = scalar_select %p455, %s33, 2
      %s457 = smul.addr %s456, 8
      %s458 = scalar_lea.vmem %s3, %s457
      %p459 = pneg %p112
      %p460 = pneg %p109
      %p461 = scmp.lt.s32.totalorder %s33, 2
      %s462 = scalar_select %p461, %s33, 2
      %s463 = smul.addr %s462, 8
      %s464 = scalar_lea.vmem %s4, %s463
      %p465 = pneg %p138
      %p466 = pneg %p135
      %p467 = pneg %p159
      %p468 = pneg %p156
      %p469 = pneg %p180
      %p470 = pneg %p177
      %p471 = pneg %p201
      %p472 = pneg %p198
      %p473 = pneg %p222
      %p474 = pneg %p219
      %p475 = pneg %p243
      %p476 = pneg %p240
      %p477 = pneg %p264
      %p478 = pneg %p261
      %p479 = pneg %p285
      %p480 = pneg %p282
      %p481 = pneg %p306
      %p482 = pneg %p303
      %p483 = pneg %p327
      %p484 = pneg %p324
      %p485 = pneg %p353
      %p486 = pneg %p350
      %p487 = scmp.lt.s32.totalorder %s33, 2
      %s488 = scalar_select %p487, %s33, 2
      %s489 = smul.addr %s488, 8
      %s490 = scalar_lea.vmem %s14, %s489
      %s491 = ssub.s32 %s33, 1
      %p492 = scmp.gt.s32.totalorder %s491, 0
      %s493 = scalar_select %p492, %s491, 0
      %p494 = scmp.lt.s32.totalorder %s493, 1
      %s495 = scalar_select %p494, %s493, 1
      %s496 = smul.addr %s495, 4
      %s497 = scalar_lea.vmem %s1, %s496
      %s498 = ssub.s32 %s33, 1
      %p499 = scmp.gt.s32.totalorder %s498, 0
      %s500 = scalar_select %p499, %s498, 0
      %p501 = scmp.lt.s32.totalorder %s33, 2
      %s502 = scalar_select %p501, %s33, 2
      %s503 = smul.addr %s502, 8
      %s504 = scalar_lea.vmem %s2, %s503
      %p505 = scmp.lt.s32.totalorder %s33, 2
      %s506 = scalar_select %p505, %s33, 2
      %s507 = smul.addr %s506, 8
      %s508 = scalar_lea.vmem %s3, %s507
      %p509 = scmp.lt.s32.totalorder %s33, 2
      %s510 = scalar_select %p509, %s33, 2
      %s511 = smul.addr %s510, 8
      %s512 = scalar_lea.vmem %s4, %s511
      %p513 = scmp.lt.s32.totalorder %s33, 2
      %s514 = scalar_select %p513, %s33, 2
      %s515 = smul.addr %s514, 8
      %s516 = scalar_lea.vmem %s14, %s515
      %p517 = scmp.eq.s32.totalorder %s33, 0
      // Predicated region
      $region73: #{_forward_jit.2} parent=71 // pred_check
        %p518 = pneg %p517
      $region74: #{_forward_jit.2} parent=71 // pred_check_branch
        %520 = sbr.rel (%p518) target = $region76
      $region75: #{_forward_jit.2} parent=71 // pred_region
        %vm521 = vcmask 261120
        %522 = vst.msk [vmem:[#allocation2] sm:$0xff] %vm521, 0.0
        %523 = vst.msk [vmem:[#allocation2 + $0x8] sm:$0xff] %vm521, 0.0
        %524 = vst.msk [vmem:[#allocation2 + $0x10] sm:$0xff] %vm521, 0.0
        %525 = vst.msk [vmem:[#allocation2 + $0x18] sm:$0xff] %vm521, 0.0
        %526 = vst.msk [vmem:[#allocation2 + $0x20] sm:$0xff] %vm521, 0.0
        %527 = vst.msk [vmem:[#allocation2 + $0x28] sm:$0xff] %vm521, 0.0
        %528 = vst.msk [vmem:[#allocation2 + $0x30] sm:$0xff] %vm521, 0.0
        %529 = vst.msk [vmem:[#allocation2 + $0x38] sm:$0xff] %vm521, 0.0
        %530 = vst.msk [vmem:[#allocation2 + $0x40] sm:$0xff] %vm521, 0.0
        %531 = vst.msk [vmem:[#allocation2 + $0x48] sm:$0xff] %vm521, 0.0
        %532 = vst.msk [vmem:[#allocation2 + $0x50] sm:$0xff] %vm521, 0.0
        %533 = vst.msk [vmem:[#allocation2 + $0x58] sm:$0xff] %vm521, 0.0
        %534 = vst.msk [vmem:[#allocation2 + $0x60] sm:$0xff] %vm521, 0.0
        %535 = vst.msk [vmem:[#allocation2 + $0x68] sm:$0xff] %vm521, 0.0
        %536 = vst.msk [vmem:[#allocation2 + $0x70] sm:$0xff] %vm521, 0.0
        %537 = vst.msk [vmem:[#allocation2 + $0x78] sm:$0xff] %vm521, 0.0
      $region76: #{_forward_jit.2} parent=71 // pred_fallthru
        _
      %s538 = smul.u32 %s33, 8
      %s539 = sld [smem:[#allocation4 + %s33]]
      %p540 = scmp.eq.s32.totalorder %s539, 1
      // Predicated region
      $region77: #{_forward_jit.2} parent=71 // pred_check
        %p541 = pneg %p540
      $region78: #{_forward_jit.2} parent=71 // pred_check_branch
        %543 = sbr.rel (%p541) target = $region80
      $region79: #{_forward_jit.2} parent=71 // pred_region
        %v544 = vld [vmem:[%s504] sm:$0xff]
        %v545 = vld [vmem:[%s5] sm:$0x1]
        %547 = vset.pattern.permute.xlu0 0
        %548 = vperm.xlu0 %547, %v544
        %v549 = vpop.permute.xlu0 %548
        %v552 = vperm.slane %v545, 0
        %v554 = vmul.f32 %v549, %v552
        %v555 = vld [vmem:[%s6] sm:$0x1]
        %v557 = vperm.slane %v555, 0
        %v559 = vadd.f32 %v554, %v557
        %vm560 = vcmp.ge.f32.partialorder %v559, 0.0
        %v561 = vmul.f32 %v559, 0.1
        %v562 = vsel %vm560, %v559, %v561
        %v563 = vld [vmem:[%s7] sm:$0xff]
        %v564 = vld [vmem:[%s7 + $0x8] sm:$0xff]
        %v565 = vld [vmem:[%s8] sm:$0x1]
        %v567 = vperm.slane %v565, 0
        %vm569 = vcmask 130048
        %v571 = vsel %vm569, %v562, 0
        %573 = vmatpush.msra.mxu0 0.0
        %574 = vmatpush.msra.mxu0 0.0
        %575 = vmatpush.msra.mxu0 0.0
        %576 = vmatpush.msra.mxu0 0.0
        %577 = vmatpush.msra.mxu0 0.0
        %578 = vmatpush.msra.mxu0 0.0
        %579 = vmatpush.msra.mxu0 0.0
        %580 = vmatpush.msra.mxu0 0.0
        %581 = vmatpush.msra.mxu0 0.0
        %582 = vmatpush.msra.mxu0 0.0
        %583 = vmatpush.msra.mxu0 0.0
        %584 = vmatpush.msra.mxu0 0.0
        %585 = vmatpush.msra.mxu0 0.0
        %586 = vmatpush.msra.mxu0 0.0
        %587 = vmatpush.msra.mxu0 %v564
        %588 = vmatpush.msra.mxu0 %v563
        %589 = vmatmul.f32.gmra.mxu0 %v571
        %v590 = vpop.f32.mrf.mxu0
        %v591 = vadd.f32 %v567, %v590
        %592 = vdwg.mxu0
        %vm593 = vcmask 261120
        %594 = vst.msk [vmem:[%s516] sm:$0xff] %vm593, %v591
        %s595 = scalar_lea.vmem [#allocation2], %s538
        %596 = vst.msk [vmem:[%s595] sm:$0xff] %vm593, %v591
      $region80: #{_forward_jit.2} parent=71 // pred_fallthru
        _
      %p597 = scmp.eq.s32.totalorder %s539, 0
      // Predicated region
      $region81: #{_forward_jit.2} parent=71 // pred_check
        %p598 = pneg %p597
      $region82: #{_forward_jit.2} parent=71 // pred_check_branch
        %600 = sbr.rel (%p598) target = $region84
      $region83: #{_forward_jit.2} parent=71 // pred_region
        %v601 = vld [vmem:[%s497] sm:$0xf]
        %v602 = vunpack.c.l.bf16 %v601
        %v603 = vld [vmem:[#allocation2] sm:$0xff]
        %v604 = vld [vmem:[#allocation2 + $0x8] sm:$0xff]
        %v605 = vld [vmem:[#allocation2 + $0x10] sm:$0xff]
        %v606 = vld [vmem:[#allocation2 + $0x18] sm:$0xff]
        %v607 = vld [vmem:[#allocation2 + $0x20] sm:$0xff]
        %v608 = vld [vmem:[#allocation2 + $0x28] sm:$0xff]
        %v609 = vld [vmem:[#allocation2 + $0x30] sm:$0xff]
        %v610 = vld [vmem:[#allocation2 + $0x38] sm:$0xff]
        %v611 = vld [vmem:[#allocation2 + $0x40] sm:$0xff]
        %v612 = vld [vmem:[#allocation2 + $0x48] sm:$0xff]
        %v613 = vld [vmem:[#allocation2 + $0x50] sm:$0xff]
        %v614 = vld [vmem:[#allocation2 + $0x58] sm:$0xff]
        %v615 = vld [vmem:[#allocation2 + $0x60] sm:$0xff]
        %v616 = vld [vmem:[#allocation2 + $0x68] sm:$0xff]
        %v617 = vld [vmem:[#allocation2 + $0x70] sm:$0xff]
        %v618 = vld [vmem:[#allocation2 + $0x78] sm:$0xff]
        %619 = vmatpush.msra.mxu0 %v618
        %620 = vmatpush.msra.mxu0 %v617
        %621 = vmatpush.msra.mxu0 %v616
        %622 = vmatpush.msra.mxu0 %v615
        %623 = vmatpush.msra.mxu0 %v614
        %624 = vmatpush.msra.mxu0 %v613
        %625 = vmatpush.msra.mxu0 %v612
        %626 = vmatpush.msra.mxu0 %v611
        %627 = vmatpush.msra.mxu0 %v610
        %628 = vmatpush.msra.mxu0 %v609
        %629 = vmatpush.msra.mxu0 %v608
        %630 = vmatpush.msra.mxu0 %v607
        %631 = vmatpush.msra.mxu0 %v606
        %632 = vmatpush.msra.mxu0 %v605
        %633 = vmatpush.msra.mxu0 %v604
        %634 = vmatpush.msra.mxu0 %v603
        %635 = vmatmul.f32.gmra.mxu0 %v602
        %v636 = vpop.f32.mrf.mxu0
        %v637 = vadd.f32 0.0, %v636
        %638 = vdwg.mxu0
        %v639 = vld [vmem:[%s9] sm:$0xff]
        %v640 = vld [vmem:[%s9 + $0x8] sm:$0xff]
        %v641 = vld [vmem:[%s9 + $0x10] sm:$0xff]
        %v642 = vld [vmem:[%s9 + $0x18] sm:$0xff]
        %v643 = vld [vmem:[%s508] sm:$0xff]
        %v644 = vld [vmem:[%s10] sm:$0xff]
        %vm645 = vcmask 64512
        %v647 = vsel %vm645, %v643, 0
        %649 = vmatpush.msra.mxu0 0.0
        %650 = vmatpush.msra.mxu0 0.0
        %651 = vmatpush.msra.mxu0 0.0
        %652 = vmatpush.msra.mxu0 0.0
        %653 = vmatpush.msra.mxu0 0.0
        %654 = vmatpush.msra.mxu0 0.0
        %655 = vmatpush.msra.mxu0 0.0
        %656 = vmatpush.msra.mxu0 0.0
        %657 = vmatpush.msra.mxu0 0.0
        %658 = vmatpush.msra.mxu0 0.0
        %659 = vmatpush.msra.mxu0 0.0
        %660 = vmatpush.msra.mxu0 0.0
        %661 = vmatpush.msra.mxu0 0.0
        %662 = vmatpush.msra.mxu0 0.0
        %663 = vmatpush.msra.mxu0 0.0
        %664 = vmatpush.msra.mxu0 %v644
        %665 = vmatmul.f32.gmra.mxu0 %v647
        %v666 = vpop.f32.mrf.mxu0
        %v667 = vadd.f32 0.0, %v666
        %668 = vdwg.mxu0
        %vm669 = vcmask 261120
        %v671 = vsel %vm669, %v637, 0
        %673 = vmatpush.msra.mxu0 0.0
        %674 = vmatpush.msra.mxu0 0.0
        %675 = vmatpush.msra.mxu0 0.0
        %676 = vmatpush.msra.mxu0 0.0
        %677 = vmatpush.msra.mxu0 0.0
        %678 = vmatpush.msra.mxu0 0.0
        %679 = vmatpush.msra.mxu0 0.0
        %680 = vmatpush.msra.mxu0 0.0
        %681 = vmatpush.msra.mxu0 0.0
        %682 = vmatpush.msra.mxu0 0.0
        %683 = vmatpush.msra.mxu0 0.0
        %684 = vmatpush.msra.mxu0 0.0
        %685 = vmatpush.msra.mxu0 %v642
        %686 = vmatpush.msra.mxu0 %v641
        %687 = vmatpush.msra.mxu0 %v640
        %688 = vmatpush.msra.mxu0 %v639
        %689 = vmatmul.f32.gmra.mxu0 %v671
        %v690 = vpop.f32.mrf.mxu0
        %v691 = vadd.f32 %v667, %v690
        %692 = vdwg.mxu0
        %v693 = vld [vmem:[%s11] sm:$0x1]
        %v695 = vperm.slane %v693, 0
        %v697 = vadd.f32 %v691, %v695
        %vm698 = vcmp.ge.f32.partialorder %v697, 0.0
        %v699 = vmul.f32 %v697, 0.1
        %v700 = vsel %vm698, %v697, %v699
        %v701 = vld [vmem:[%s12] sm:$0xff]
        %v702 = vld [vmem:[%s12 + $0x8] sm:$0xff]
        %v703 = vld [vmem:[%s12 + $0x10] sm:$0xff]
        %v704 = vld [vmem:[%s12 + $0x18] sm:$0xff]
        %v705 = vld [vmem:[%s13] sm:$0x1]
        %v707 = vperm.slane %v705, 0
        %v710 = vsel %vm669, %v700, 0
        %712 = vmatpush.msra.mxu0 0.0
        %713 = vmatpush.msra.mxu0 0.0
        %714 = vmatpush.msra.mxu0 0.0
        %715 = vmatpush.msra.mxu0 0.0
        %716 = vmatpush.msra.mxu0 0.0
        %717 = vmatpush.msra.mxu0 0.0
        %718 = vmatpush.msra.mxu0 0.0
        %719 = vmatpush.msra.mxu0 0.0
        %720 = vmatpush.msra.mxu0 0.0
        %721 = vmatpush.msra.mxu0 0.0
        %722 = vmatpush.msra.mxu0 0.0
        %723 = vmatpush.msra.mxu0 0.0
        %724 = vmatpush.msra.mxu0 %v704
        %725 = vmatpush.msra.mxu0 %v703
        %726 = vmatpush.msra.mxu0 %v702
        %727 = vmatpush.msra.mxu0 %v701
        %728 = vmatmul.f32.gmra.mxu0 %v710
        %v729 = vpop.f32.mrf.mxu0
        %v730 = vadd.f32 %v707, %v729
        %731 = vdwg.mxu0
        %v732 = vld [vmem:[%s512] sm:$0xff]
        %vm733 = vcmp.eq.f32.partialorder %v732, 1.0
        %v734 = vmax.f32 %v730, 0.0
        %v735 = vsel %vm733, 1, 0
        %736 = vset.pattern.permute.xlu0 0
        %737 = vperm.xlu0 %736, %v735
        %v738 = vpop.permute.xlu0 %737
        %vm739 = vcmp.eq.s32.totalorder %v738, 1
        %v740 = vsel %vm739, %v730, %v734
        %741 = vst.msk [vmem:[%s516] sm:$0xff] %vm669, %v740
        %s742 = scalar_lea.vmem [#allocation2], %s538
        %743 = vst.msk [vmem:[%s742] sm:$0xff] %vm669, %v740
      $region84: #{_forward_jit.2} parent=71 // pred_fallthru
        _
      %p744 = scmp.lt.s32.totalorder %s33, 2
      %s745 = scalar_select %p744, %s33, 2
      %s746 = smul.addr %s745, 8
      %s747 = scalar_lea.vmem %s14, %s746
      // Predicated region
      $region85: #{_forward_jit.2} parent=71 // pred_check
        %p748 = pneg %p350
      $region86: #{_forward_jit.2} parent=71 // pred_check_branch
        %750 = sbr.rel (%p748) target = $region88
      $region87: #{_forward_jit.2} parent=71 // pred_region
        _
      $region88: #{_forward_jit.2} parent=71 // pred_fallthru
        _
    $region72: #{_forward_jit.2} parent=5 // pred_fallthru
      _
    %p751 = scmp.le.s32.totalorder 2, %s28
    // Predicated region
    $region89: #{_forward_jit.2} parent=5 // pred_check
      %p752 = pneg %p751
    $region90: #{_forward_jit.2} parent=5 // pred_check_branch
      %754 = sbr.rel (%p752) target = $region92
    $region91: #{_forward_jit.2} parent=5 // pred_region
      %s755 = ssub.s32 %s28, 2
      // Predicated region
      $region93: #{_forward_jit.2} parent=91 // pred_check
        %p756 = pneg %p356
      $region94: #{_forward_jit.2} parent=91 // pred_check_branch
        %758 = sbr.rel (%p756) target = $region96
      $region95: #{_forward_jit.2} parent=91 // pred_region
        %p759 = scmp.lt.s32.totalorder %s34, 2
        %s760 = scalar_select %p759, %s34, 2
        %s761 = smul.addr %s760, 8
        %s762 = scalar_lea.vmem %s14, %s761
      $region96: #{_forward_jit.2} parent=91 // pred_fallthru
        _
    $region92: #{_forward_jit.2} parent=5 // pred_fallthru
      _
  $region6: #{_forward_jit.2} parent=0 // loop_footer
    %s32 = sadd.s32 1, %s28
  $region7: #{_forward_jit.2} parent=0 // loop_footer_branch
    %27 = sbr.rel target = $region3
  $region8: #{_forward_jit.2} parent=0 // loop_exit
    _

</llo_original>
